<compile_context>
chip_gen: v6e
topology: v6e:2x2x1
jax: 0.10.0
libtpu: 0.0.40
codegen_flags: <defaults>
</compile_context>

<pallas_src>
import jax
import jax.numpy as jnp
from jax.experimental import pallas as pl
from jax.experimental.pallas import tpu as pltpu

INPUT_SIZE = 784
HIDDEN_SIZE = 500
NUM_CLASSES = 10

# lane-dense padded dims (multiples of 128)
IN_PAD = 896    # 7 * 128
HID_PAD = 512   # 4 * 128
OUT_PAD = 128   # 1 * 128


def mlp_kernel(x_ref, w1_ref, b1_ref, w2_ref, b2_ref, out_ref):
    # fc1: (TB, 896)bf16 @ (896, 512)bf16 -> f32 accumulate
    h = jnp.dot(x_ref[...], w1_ref[...], preferred_element_type=jnp.float32)
    h = jnp.maximum(h + b1_ref[...], 0.0)
    # fc2: (TB, 512)bf16 @ (512, 128)bf16 -> f32 accumulate
    o = jnp.dot(h.astype(jnp.bfloat16), w2_ref[...],
                preferred_element_type=jnp.float32)
    out_ref[...] = (o + b2_ref[...]).astype(out_ref.dtype)


def _pad_to(x, target, axis):
    pad = target - x.shape[axis]
    if pad == 0:
        return x
    cfg = [(0, 0)] * x.ndim
    cfg[axis] = (0, pad)
    return jnp.pad(x, cfg)


def neural_net_forward(x, w1, b1, w2, b2, *, block_b=256):
    """Forward pass of NeuralNet: fc2(relu(fc1(x.reshape(-1, 784))))."""
    # reshape glue stays in plain JAX (matches x.reshape(-1, input_size))
    x2d = x.reshape(-1, INPUT_SIZE)
    batch = x2d.shape[0]

    # batch tile: multiple of 8 sublanes, at most block_b rows
    tb = min(block_b, max(8, ((batch + 7) // 8) * 8))
    b_pad = ((batch + tb - 1) // tb) * tb

    # zero-pad to lane-dense shapes; cast matmul operands to bf16
    xp = _pad_to(_pad_to(x2d, b_pad, 0), IN_PAD, 1).astype(jnp.bfloat16)
    w1p = _pad_to(_pad_to(w1, IN_PAD, 0), HID_PAD, 1).astype(jnp.bfloat16)
    b1p = _pad_to(b1.reshape(1, -1), HID_PAD, 1).astype(jnp.float32)
    w2p = _pad_to(_pad_to(w2, HID_PAD, 0), OUT_PAD, 1).astype(jnp.bfloat16)
    b2p = _pad_to(b2.reshape(1, -1), OUT_PAD, 1).astype(jnp.float32)

    grid = (b_pad // tb,)

    out = pl.pallas_call(
        mlp_kernel,
        out_shape=jax.ShapeDtypeStruct((b_pad, OUT_PAD), jnp.float32),
        grid=grid,
        in_specs=[
            # x tile streams over the batch grid axis
            pl.BlockSpec((tb, IN_PAD), lambda i: (i, 0)),
            # weights / biases stay VMEM-resident (same block every step)
            pl.BlockSpec((IN_PAD, HID_PAD), lambda i: (0, 0)),
            pl.BlockSpec((1, HID_PAD), lambda i: (0, 0)),
            pl.BlockSpec((HID_PAD, OUT_PAD), lambda i: (0, 0)),
            pl.BlockSpec((1, OUT_PAD), lambda i: (0, 0)),
        ],
        out_specs=pl.BlockSpec((tb, OUT_PAD), lambda i: (i, 0)),
        compiler_params=pltpu.CompilerParams(
            dimension_semantics=("parallel",)),
    )(xp, w1p, b1p, w2p, b2p)

    # strip batch + class padding
    return out[:batch, :NUM_CLASSES]


def init_params(key):
    """Deterministic init mimicking nn.Linear's uniform(-1/sqrt(fan_in), 1/sqrt(fan_in))."""
    k1, k2, k3, k4 = jax.random.split(key, 4)
    lim1 = 1.0 / jnp.sqrt(jnp.float32(INPUT_SIZE))
    lim2 = 1.0 / jnp.sqrt(jnp.float32(HIDDEN_SIZE))
    w1 = jax.random.uniform(k1, (INPUT_SIZE, HIDDEN_SIZE), jnp.float32, -lim1, lim1)
    b1 = jax.random.uniform(k2, (1, HIDDEN_SIZE), jnp.float32, -lim1, lim1)
    w2 = jax.random.uniform(k3, (HIDDEN_SIZE, NUM_CLASSES), jnp.float32, -lim2, lim2)
    b2 = jax.random.uniform(k4, (1, NUM_CLASSES), jnp.float32, -lim2, lim2)
    return w1, b1, w2, b2


if __name__ == "__main__":
    key = jax.random.PRNGKey(0)
    kx, kp = jax.random.split(key)

    # small batch of MNIST-like inputs (B, 1, 28, 28) -> reshaped to (B, 784)
    batch = 8
    x = jax.random.normal(kx, (batch, 1, 28, 28), jnp.float32)
    w1, b1, w2, b2 = init_params(kp)

    out = neural_net_forward(x, w1, b1, w2, b2)
    out = jax.block_until_ready(out)
    assert out.shape == (batch, NUM_CLASSES)

    # reference in plain JAX, matching the kernel's bf16 operand casts
    x2d = x.reshape(-1, INPUT_SIZE)
    xb = x2d.astype(jnp.bfloat16).astype(jnp.float32)
    w1b = w1.astype(jnp.bfloat16).astype(jnp.float32)
    w2b = w2.astype(jnp.bfloat16).astype(jnp.float32)
    h = jnp.maximum(xb @ w1b + b1, 0.0)
    ref = h.astype(jnp.bfloat16).astype(jnp.float32) @ w2b + b2
    assert jnp.allclose(out, ref, atol=5e-3, rtol=1e-2), (
        float(jnp.max(jnp.abs(out - ref))))

    # sanity: also close (loosely) to the full-f32 forward
    ref_f32 = jnp.maximum(x2d @ w1 + b1, 0.0) @ w2 + b2
    assert jnp.max(jnp.abs(out - ref_f32)) < 0.1

    print("KERNEL_OK")
</pallas_src>

<mosaic_0001>
module attributes {stable_mosaic.version = 11 : i64} {
  func.func @mlp_kernel(%arg0: i32, %arg1: memref<8x896xbf16, #tpu.memory_space<vmem>>, %arg2: memref<896x512xbf16, #tpu.memory_space<vmem>>, %arg3: memref<1x512xf32, #tpu.memory_space<vmem>>, %arg4: memref<512x128xbf16, #tpu.memory_space<vmem>>, %arg5: memref<1x128xf32, #tpu.memory_space<vmem>>, %arg6: memref<8x128xf32, #tpu.memory_space<vmem>>) attributes {dimension_semantics = [#tpu.dimension_semantics<parallel>], iteration_bounds = array<i64: 1>, scalar_prefetch = 0 : i64, scratch_operands = 0 : i64, tpu.core_type = #tpu.core_type<tc>, window_params = [{transform_indices = @transform_0, window_bounds = array<i64: 8, 896>}, {pipeline_mode = #tpu.pipeline_mode<synchronous>, transform_indices = @transform_1, window_bounds = array<i64: 896, 512>}, {pipeline_mode = #tpu.pipeline_mode<synchronous>, transform_indices = @transform_2, window_bounds = array<i64: 1, 512>}, {pipeline_mode = #tpu.pipeline_mode<synchronous>, transform_indices = @transform_3, window_bounds = array<i64: 512, 128>}, {pipeline_mode = #tpu.pipeline_mode<synchronous>, transform_indices = @transform_4, window_bounds = array<i64: 1, 128>}, {transform_indices = @transform_5, window_bounds = array<i64: 8, 128>}]} {
    %c0 = arith.constant 0 : index
    %c0_0 = arith.constant 0 : index
    %0 = vector.load %arg1[%c0, %c0_0] : memref<8x896xbf16, #tpu.memory_space<vmem>>, vector<8x896xbf16>
    %c0_1 = arith.constant 0 : index
    %c0_2 = arith.constant 0 : index
    %1 = vector.load %arg2[%c0_1, %c0_2] : memref<896x512xbf16, #tpu.memory_space<vmem>>, vector<896x512xbf16>
    %cst = arith.constant dense<0.000000e+00> : vector<8x512xf32>
    %2 = tpu.matmul %0, %1, %cst {dimension_numbers = #tpu.dot_dimension_numbers<[1], [0], [0], [1], [0, 0, 1, 1], [], []>} : vector<8x896xbf16>, vector<896x512xbf16>, vector<8x512xf32> -> vector<8x512xf32>
    %c0_3 = arith.constant 0 : index
    %c0_4 = arith.constant 0 : index
    %3 = vector.load %arg3[%c0_3, %c0_4] : memref<1x512xf32, #tpu.memory_space<vmem>>, vector<1x512xf32>
    %4 = vector.broadcast %3 : vector<1x512xf32> to vector<8x512xf32>
    %5 = arith.addf %2, %4 : vector<8x512xf32>
    %cst_5 = arith.constant 0.000000e+00 : f32
    %6 = vector.broadcast %cst_5 : f32 to vector<8x512xf32>
    %7 = arith.maximumf %5, %6 : vector<8x512xf32>
    %8 = arith.truncf %7 : vector<8x512xf32> to vector<8x512xbf16>
    %c0_6 = arith.constant 0 : index
    %c0_7 = arith.constant 0 : index
    %9 = vector.load %arg4[%c0_6, %c0_7] : memref<512x128xbf16, #tpu.memory_space<vmem>>, vector<512x128xbf16>
    %cst_8 = arith.constant dense<0.000000e+00> : vector<8x128xf32>
    %10 = tpu.matmul %8, %9, %cst_8 {dimension_numbers = #tpu.dot_dimension_numbers<[1], [0], [0], [1], [0, 0, 1, 1], [], []>} : vector<8x512xbf16>, vector<512x128xbf16>, vector<8x128xf32> -> vector<8x128xf32>
    %c0_9 = arith.constant 0 : index
    %c0_10 = arith.constant 0 : index
    %11 = vector.load %arg5[%c0_9, %c0_10] : memref<1x128xf32, #tpu.memory_space<vmem>>, vector<1x128xf32>
    %12 = vector.broadcast %11 : vector<1x128xf32> to vector<8x128xf32>
    %13 = arith.addf %10, %12 : vector<8x128xf32>
    %c0_11 = arith.constant 0 : index
    %c0_12 = arith.constant 0 : index
    %14 = vector.load %arg6[%c0_11, %c0_12] : memref<8x128xf32, #tpu.memory_space<vmem>>, vector<8x128xf32>
    tpu.vector_store %arg6[%c0_11, %c0_12], %13 {strides = array<i32>} : memref<8x128xf32, #tpu.memory_space<vmem>>, vector<8x128xf32>,
    return
  }
  func.func @transform_0(%arg0: i32) -> (i32, i32) {
    %c0_i32 = arith.constant 0 : i32
    %c0_i32_0 = arith.constant 0 : i32
    return %arg0, %c0_i32 : i32, i32
  }
  func.func @transform_1(%arg0: i32) -> (i32, i32) {
    %c0_i32 = arith.constant 0 : i32
    %c0_i32_0 = arith.constant 0 : i32
    %c0_i32_1 = arith.constant 0 : i32
    return %c0_i32, %c0_i32_0 : i32, i32
  }
  func.func @transform_2(%arg0: i32) -> (i32, i32) {
    %c0_i32 = arith.constant 0 : i32
    %c0_i32_0 = arith.constant 0 : i32
    %c0_i32_1 = arith.constant 0 : i32
    return %c0_i32, %c0_i32_0 : i32, i32
  }
  func.func @transform_3(%arg0: i32) -> (i32, i32) {
    %c0_i32 = arith.constant 0 : i32
    %c0_i32_0 = arith.constant 0 : i32
    %c0_i32_1 = arith.constant 0 : i32
    return %c0_i32, %c0_i32_0 : i32, i32
  }
  func.func @transform_4(%arg0: i32) -> (i32, i32) {
    %c0_i32 = arith.constant 0 : i32
    %c0_i32_0 = arith.constant 0 : i32
    %c0_i32_1 = arith.constant 0 : i32
    return %c0_i32, %c0_i32_0 : i32, i32
  }
  func.func @transform_5(%arg0: i32) -> (i32, i32) {
    %c0_i32 = arith.constant 0 : i32
    %c0_i32_0 = arith.constant 0 : i32
    return %arg0, %c0_i32 : i32, i32
  }
}

</mosaic_0001>

<llo_original>
// kernel: tpu_custom_call.1
$region0: #{tpu_custom_call.1}
  #allocation0 [shape = 'u32[]', space=smem, size = 0x4, offset = 0x4, fixed_abs, tag = 'smem constant byte address 0x4 - core index']
  #allocation1 [shape = 'u32[144,128]{1,0:T(1,128)}', space=vmem, size = 0x12000, scoped, tag = 'internal scratch']
  %s0 = inlined_call_operand.hbm [shape: bf16[8,896], index: 0, kind: input, shape index: {}]
  %s1 = inlined_call_operand.hbm [shape: bf16[896,512], index: 1, kind: input, shape index: {}]
  %s2 = inlined_call_operand.hbm [shape: f32[1,512], index: 2, kind: input, shape index: {}]
  %s3 = inlined_call_operand.hbm [shape: bf16[512,128], index: 3, kind: input, shape index: {}]
  %s4 = inlined_call_operand.vmem [shape: f32[1,128], index: 4, kind: input, shape index: {}]
  %s5 = inlined_call_operand.hbm [shape: f32[8,128], index: 5, kind: output, shape index: {}]
  %s6 = sld [smem:[#allocation0]]
  $region46: #{tpu_custom_call.1} parent=0
    _
  %s8 = ssub.s32 1, %s6
  %s9 = scalar_select 0, %s8, %s6
  $region1: #{tpu_custom_call.1} parent=0
    #allocation2 [shape = 'u8[14336]{0}', space=vmem, size = 0x3800, scoped, tag = 'input window, operand 0, single buffered']
    #allocation3 [shape = 's32[1]{0}', space=sflag, size = 0x4, scoped, tag = 'scoped memory for tpu_custom_call.1']
    #allocation4 [shape = 's32[1]{0}', space=sflag, size = 0x4, scoped, tag = 'scoped memory for tpu_custom_call.1']
    #allocation5 [shape = 'u8[917504]{0}', space=vmem, size = 0xe0000, scoped, tag = 'input window, operand 1, single buffered']
    #allocation6 [shape = 's32[1]{0}', space=sflag, size = 0x4, scoped, tag = 'scoped memory for tpu_custom_call.1']
    #allocation7 [shape = 'u8[2048]{0}', space=vmem, size = 0x800, scoped, tag = 'input window, operand 2, single buffered']
    #allocation8 [shape = 'u8[131072]{0}', space=vmem, size = 0x20000, scoped, tag = 'input window, operand 3, single buffered']
    #allocation9 [shape = 's32[1]{0}', space=sflag, size = 0x4, scoped, tag = 'scoped memory for tpu_custom_call.1']
    #allocation10 [shape = 'u8[4096]{0}', space=vmem, size = 0x1000, scoped, tag = 'output window, operand 0, single buffered']
    %10 = vsyncpa [#allocation3], 0
    %11 = vsyncpa [#allocation6], 0
    %12 = vsyncpa [#allocation9], 0
    %13 = vsyncpa [#allocation4], 0
    // Predicated region
    $region2: #{tpu_custom_call.1} parent=1 // pred_check
      _
    $region3: #{tpu_custom_call.1} parent=1 // pred_check_branch
      %15 = sbr.rel (0) target = $region5
    $region4: #{tpu_custom_call.1} parent=1 // pred_region
      %s17 = ssub.s32 448, 448
      %18 = vsyncadd [#allocation3], %s17
      %s20 = sshll.u32 [#allocation2], 4
      %s21 = int_to_ptr.vmem [resolvable:$true] %s20
      %23 = dma.hbm_to_vmem [thread:$0]  %s0, 448, %s21, [#allocation3]
    $region5: #{tpu_custom_call.1} parent=1 // pred_fallthru
      _
    // Predicated region
    $region6: #{tpu_custom_call.1} parent=1 // pred_check
      _
    $region7: #{tpu_custom_call.1} parent=1 // pred_check_branch
      %25 = sbr.rel (0) target = $region9
    $region8: #{tpu_custom_call.1} parent=1 // pred_region
      %s27 = ssub.s32 28672, 28672
      %28 = vsyncadd [#allocation6], %s27
      %s29 = sshll.u32 [#allocation5], 4
      %s30 = int_to_ptr.vmem [resolvable:$true] %s29
      %35 = dma.hbm_to_vmem [thread:$0]  %s1, 28672, %s30, [#allocation6], 256, 256, 16
    $region9: #{tpu_custom_call.1} parent=1 // pred_fallthru
      _
    // Predicated region
    $region10: #{tpu_custom_call.1} parent=1 // pred_check
      _
    $region11: #{tpu_custom_call.1} parent=1 // pred_check_branch
      %37 = sbr.rel (0) target = $region13
    $region12: #{tpu_custom_call.1} parent=1 // pred_region
      %s39 = ssub.s32 64, 64
      %40 = vsyncadd [#allocation6], %s39
      %s42 = sshll.u32 [#allocation7], 4
      %s43 = int_to_ptr.vmem [resolvable:$true] %s42
      %45 = dma.hbm_to_vmem [thread:$0]  %s2, 64, %s43, [#allocation6]
    $region13: #{tpu_custom_call.1} parent=1 // pred_fallthru
      _
    // Predicated region
    $region14: #{tpu_custom_call.1} parent=1 // pred_check
      _
    $region15: #{tpu_custom_call.1} parent=1 // pred_check_branch
      %47 = sbr.rel (0) target = $region17
    $region16: #{tpu_custom_call.1} parent=1 // pred_region
      %s49 = ssub.s32 4096, 4096
      %50 = vsyncadd [#allocation9], %s49
      %s51 = sshll.u32 [#allocation8], 4
      %s52 = int_to_ptr.vmem [resolvable:$true] %s51
      %57 = dma.hbm_to_vmem [thread:$0]  %s3, 4096, %s52, [#allocation9], 64, 64, 4
    $region17: #{tpu_custom_call.1} parent=1 // pred_fallthru
      _
    // Predicated region
    $region18: #{tpu_custom_call.1} parent=1 // pred_check
      _
    $region19: #{tpu_custom_call.1} parent=1 // pred_check_branch
      %59 = sbr.rel (0) target = $region21
    $region20: #{tpu_custom_call.1} parent=1 // pred_region
      _
    $region21: #{tpu_custom_call.1} parent=1 // pred_fallthru
      _
    // Predicated region
    $region22: #{tpu_custom_call.1} parent=1 // pred_check
      _
    $region23: #{tpu_custom_call.1} parent=1 // pred_check_branch
      %61 = sbr.rel (0) target = $region25
    $region24: #{tpu_custom_call.1} parent=1 // pred_region
      %62 = dma.done [#allocation3], 448
    $region25: #{tpu_custom_call.1} parent=1 // pred_fallthru
      _
    // Predicated region
    $region26: #{tpu_custom_call.1} parent=1 // pred_check
      _
    $region27: #{tpu_custom_call.1} parent=1 // pred_check_branch
      %64 = sbr.rel (0) target = $region29
    $region28: #{tpu_custom_call.1} parent=1 // pred_region
      %65 = dma.done [#allocation6], 28672
    $region29: #{tpu_custom_call.1} parent=1 // pred_fallthru
      _
    // Predicated region
    $region30: #{tpu_custom_call.1} parent=1 // pred_check
      _
    $region31: #{tpu_custom_call.1} parent=1 // pred_check_branch
      %67 = sbr.rel (0) target = $region33
    $region32: #{tpu_custom_call.1} parent=1 // pred_region
      %68 = dma.done [#allocation6], 64
    $region33: #{tpu_custom_call.1} parent=1 // pred_fallthru
      _
    // Predicated region
    $region34: #{tpu_custom_call.1} parent=1 // pred_check
      _
    $region35: #{tpu_custom_call.1} parent=1 // pred_check_branch
      %70 = sbr.rel (0) target = $region37
    $region36: #{tpu_custom_call.1} parent=1 // pred_region
      %71 = dma.done [#allocation9], 4096
    $region37: #{tpu_custom_call.1} parent=1 // pred_fallthru
      _
    %v73 = vld [vmem:[#allocation2] sm:$0xff]
    %v74 = vld [vmem:[#allocation2 + $0x8] sm:$0xff]
    %v75 = vld [vmem:[#allocation2 + $0x10] sm:$0xff]
    %v76 = vld [vmem:[#allocation2 + $0x18] sm:$0xf]
    %v77 = vld [vmem:[#allocation5] sm:$0xff]
    %v78 = vld [vmem:[#allocation5 + $0x8] sm:$0xff]
    %v79 = vld [vmem:[#allocation5 + $0x10] sm:$0xff]
    %v80 = vld [vmem:[#allocation5 + $0x18] sm:$0xff]
    %v81 = vld [vmem:[#allocation5 + $0x20] sm:$0xff]
    %v82 = vld [vmem:[#allocation5 + $0x28] sm:$0xff]
    %v83 = vld [vmem:[#allocation5 + $0x30] sm:$0xff]
    %v84 = vld [vmem:[#allocation5 + $0x38] sm:$0xff]
    %v85 = vld [vmem:[#allocation5 + $0x40] sm:$0xff]
    %v86 = vld [vmem:[#allocation5 + $0x48] sm:$0xff]
    %v87 = vld [vmem:[#allocation5 + $0x50] sm:$0xff]
    %v88 = vld [vmem:[#allocation5 + $0x58] sm:$0xff]
    %v89 = vld [vmem:[#allocation5 + $0x60] sm:$0xff]
    %v90 = vld [vmem:[#allocation5 + $0x68] sm:$0xff]
    %v91 = vld [vmem:[#allocation5 + $0x70] sm:$0xff]
    %v92 = vld [vmem:[#allocation5 + $0x78] sm:$0xff]
    %v93 = vld [vmem:[#allocation5 + $0x80] sm:$0xff]
    %v94 = vld [vmem:[#allocation5 + $0x88] sm:$0xff]
    %v95 = vld [vmem:[#allocation5 + $0x90] sm:$0xff]
    %v96 = vld [vmem:[#allocation5 + $0x98] sm:$0xff]
    %v97 = vld [vmem:[#allocation5 + $0xa0] sm:$0xff]
    %v98 = vld [vmem:[#allocation5 + $0xa8] sm:$0xff]
    %v99 = vld [vmem:[#allocation5 + $0xb0] sm:$0xff]
    %v100 = vld [vmem:[#allocation5 + $0xb8] sm:$0xff]
    %v101 = vld [vmem:[#allocation5 + $0xc0] sm:$0xff]
    %v102 = vld [vmem:[#allocation5 + $0xc8] sm:$0xff]
    %v103 = vld [vmem:[#allocation5 + $0xd0] sm:$0xff]
    %v104 = vld [vmem:[#allocation5 + $0xd8] sm:$0xff]
    %v105 = vld [vmem:[#allocation5 + $0xe0] sm:$0xff]
    %v106 = vld [vmem:[#allocation5 + $0xe8] sm:$0xff]
    %v107 = vld [vmem:[#allocation5 + $0xf0] sm:$0xff]
    %v108 = vld [vmem:[#allocation5 + $0xf8] sm:$0xff]
    %v109 = vld [vmem:[#allocation5 + $0x100] sm:$0xff]
    %v110 = vld [vmem:[#allocation5 + $0x108] sm:$0xff]
    %v111 = vld [vmem:[#allocation5 + $0x110] sm:$0xff]
    %v112 = vld [vmem:[#allocation5 + $0x118] sm:$0xff]
    %v113 = vld [vmem:[#allocation5 + $0x120] sm:$0xff]
    %v114 = vld [vmem:[#allocation5 + $0x128] sm:$0xff]
    %v115 = vld [vmem:[#allocation5 + $0x130] sm:$0xff]
    %v116 = vld [vmem:[#allocation5 + $0x138] sm:$0xff]
    %v117 = vld [vmem:[#allocation5 + $0x140] sm:$0xff]
    %v118 = vld [vmem:[#allocation5 + $0x148] sm:$0xff]
    %v119 = vld [vmem:[#allocation5 + $0x150] sm:$0xff]
    %v120 = vld [vmem:[#allocation5 + $0x158] sm:$0xff]
    %v121 = vld [vmem:[#allocation5 + $0x160] sm:$0xff]
    %v122 = vld [vmem:[#allocation5 + $0x168] sm:$0xff]
    %v123 = vld [vmem:[#allocation5 + $0x170] sm:$0xff]
    %v124 = vld [vmem:[#allocation5 + $0x178] sm:$0xff]
    %v125 = vld [vmem:[#allocation5 + $0x180] sm:$0xff]
    %v126 = vld [vmem:[#allocation5 + $0x188] sm:$0xff]
    %v127 = vld [vmem:[#allocation5 + $0x190] sm:$0xff]
    %v128 = vld [vmem:[#allocation5 + $0x198] sm:$0xff]
    %v129 = vld [vmem:[#allocation5 + $0x1a0] sm:$0xff]
    %v130 = vld [vmem:[#allocation5 + $0x1a8] sm:$0xff]
    %v131 = vld [vmem:[#allocation5 + $0x1b0] sm:$0xff]
    %v132 = vld [vmem:[#allocation5 + $0x1b8] sm:$0xff]
    %v133 = vld [vmem:[#allocation5 + $0x1c0] sm:$0xff]
    %v134 = vld [vmem:[#allocation5 + $0x1c8] sm:$0xff]
    %v135 = vld [vmem:[#allocation5 + $0x1d0] sm:$0xff]
    %v136 = vld [vmem:[#allocation5 + $0x1d8] sm:$0xff]
    %v137 = vld [vmem:[#allocation5 + $0x1e0] sm:$0xff]
    %v138 = vld [vmem:[#allocation5 + $0x1e8] sm:$0xff]
    %v139 = vld [vmem:[#allocation5 + $0x1f0] sm:$0xff]
    %v140 = vld [vmem:[#allocation5 + $0x1f8] sm:$0xff]
    %v141 = vld [vmem:[#allocation5 + $0x200] sm:$0xff]
    %v142 = vld [vmem:[#allocation5 + $0x208] sm:$0xff]
    %v143 = vld [vmem:[#allocation5 + $0x210] sm:$0xff]
    %v144 = vld [vmem:[#allocation5 + $0x218] sm:$0xff]
    %v145 = vld [vmem:[#allocation5 + $0x220] sm:$0xff]
    %v146 = vld [vmem:[#allocation5 + $0x228] sm:$0xff]
    %v147 = vld [vmem:[#allocation5 + $0x230] sm:$0xff]
    %v148 = vld [vmem:[#allocation5 + $0x238] sm:$0xff]
    %v149 = vld [vmem:[#allocation5 + $0x240] sm:$0xff]
    %v150 = vld [vmem:[#allocation5 + $0x248] sm:$0xff]
    %v151 = vld [vmem:[#allocation5 + $0x250] sm:$0xff]
    %v152 = vld [vmem:[#allocation5 + $0x258] sm:$0xff]
    %v153 = vld [vmem:[#allocation5 + $0x260] sm:$0xff]
    %v154 = vld [vmem:[#allocation5 + $0x268] sm:$0xff]
    %v155 = vld [vmem:[#allocation5 + $0x270] sm:$0xff]
    %v156 = vld [vmem:[#allocation5 + $0x278] sm:$0xff]
    %v157 = vld [vmem:[#allocation5 + $0x280] sm:$0xff]
    %v158 = vld [vmem:[#allocation5 + $0x288] sm:$0xff]
    %v159 = vld [vmem:[#allocation5 + $0x290] sm:$0xff]
    %v160 = vld [vmem:[#allocation5 + $0x298] sm:$0xff]
    %v161 = vld [vmem:[#allocation5 + $0x2a0] sm:$0xff]
    %v162 = vld [vmem:[#allocation5 + $0x2a8] sm:$0xff]
    %v163 = vld [vmem:[#allocation5 + $0x2b0] sm:$0xff]
    %v164 = vld [vmem:[#allocation5 + $0x2b8] sm:$0xff]
    %v165 = vld [vmem:[#allocation5 + $0x2c0] sm:$0xff]
    %v166 = vld [vmem:[#allocation5 + $0x2c8] sm:$0xff]
    %v167 = vld [vmem:[#allocation5 + $0x2d0] sm:$0xff]
    %v168 = vld [vmem:[#allocation5 + $0x2d8] sm:$0xff]
    %v169 = vld [vmem:[#allocation5 + $0x2e0] sm:$0xff]
    %v170 = vld [vmem:[#allocation5 + $0x2e8] sm:$0xff]
    %v171 = vld [vmem:[#allocation5 + $0x2f0] sm:$0xff]
    %v172 = vld [vmem:[#allocation5 + $0x2f8] sm:$0xff]
    %v173 = vld [vmem:[#allocation5 + $0x300] sm:$0xff]
    %v174 = vld [vmem:[#allocation5 + $0x308] sm:$0xff]
    %v175 = vld [vmem:[#allocation5 + $0x310] sm:$0xff]
    %v176 = vld [vmem:[#allocation5 + $0x318] sm:$0xff]
    %v177 = vld [vmem:[#allocation5 + $0x320] sm:$0xff]
    %v178 = vld [vmem:[#allocation5 + $0x328] sm:$0xff]
    %v179 = vld [vmem:[#allocation5 + $0x330] sm:$0xff]
    %v180 = vld [vmem:[#allocation5 + $0x338] sm:$0xff]
    %v181 = vld [vmem:[#allocation5 + $0x340] sm:$0xff]
    %v182 = vld [vmem:[#allocation5 + $0x348] sm:$0xff]
    %v183 = vld [vmem:[#allocation5 + $0x350] sm:$0xff]
    %v184 = vld [vmem:[#allocation5 + $0x358] sm:$0xff]
    %v185 = vld [vmem:[#allocation5 + $0x360] sm:$0xff]
    %v186 = vld [vmem:[#allocation5 + $0x368] sm:$0xff]
    %v187 = vld [vmem:[#allocation5 + $0x370] sm:$0xff]
    %v188 = vld [vmem:[#allocation5 + $0x378] sm:$0xff]
    %v189 = vld [vmem:[#allocation5 + $0x380] sm:$0xff]
    %v190 = vld [vmem:[#allocation5 + $0x388] sm:$0xff]
    %v191 = vld [vmem:[#allocation5 + $0x390] sm:$0xff]
    %v192 = vld [vmem:[#allocation5 + $0x398] sm:$0xff]
    %v193 = vld [vmem:[#allocation5 + $0x3a0] sm:$0xff]
    %v194 = vld [vmem:[#allocation5 + $0x3a8] sm:$0xff]
    %v195 = vld [vmem:[#allocation5 + $0x3b0] sm:$0xff]
    %v196 = vld [vmem:[#allocation5 + $0x3b8] sm:$0xff]
    %v197 = vld [vmem:[#allocation5 + $0x3c0] sm:$0xff]
    %v198 = vld [vmem:[#allocation5 + $0x3c8] sm:$0xff]
    %v199 = vld [vmem:[#allocation5 + $0x3d0] sm:$0xff]
    %v200 = vld [vmem:[#allocation5 + $0x3d8] sm:$0xff]
    %v201 = vld [vmem:[#allocation5 + $0x3e0] sm:$0xff]
    %v202 = vld [vmem:[#allocation5 + $0x3e8] sm:$0xff]
    %v203 = vld [vmem:[#allocation5 + $0x3f0] sm:$0xff]
    %v204 = vld [vmem:[#allocation5 + $0x3f8] sm:$0xff]
    %v205 = vld [vmem:[#allocation5 + $0x400] sm:$0xff]
    %v206 = vld [vmem:[#allocation5 + $0x408] sm:$0xff]
    %v207 = vld [vmem:[#allocation5 + $0x410] sm:$0xff]
    %v208 = vld [vmem:[#allocation5 + $0x418] sm:$0xff]
    %v209 = vld [vmem:[#allocation5 + $0x420] sm:$0xff]
    %v210 = vld [vmem:[#allocation5 + $0x428] sm:$0xff]
    %v211 = vld [vmem:[#allocation5 + $0x430] sm:$0xff]
    %v212 = vld [vmem:[#allocation5 + $0x438] sm:$0xff]
    %v213 = vld [vmem:[#allocation5 + $0x440] sm:$0xff]
    %v214 = vld [vmem:[#allocation5 + $0x448] sm:$0xff]
    %v215 = vld [vmem:[#allocation5 + $0x450] sm:$0xff]
    %v216 = vld [vmem:[#allocation5 + $0x458] sm:$0xff]
    %v217 = vld [vmem:[#allocation5 + $0x460] sm:$0xff]
    %v218 = vld [vmem:[#allocation5 + $0x468] sm:$0xff]
    %v219 = vld [vmem:[#allocation5 + $0x470] sm:$0xff]
    %v220 = vld [vmem:[#allocation5 + $0x478] sm:$0xff]
    %v221 = vld [vmem:[#allocation5 + $0x480] sm:$0xff]
    %v222 = vld [vmem:[#allocation5 + $0x488] sm:$0xff]
    %v223 = vld [vmem:[#allocation5 + $0x490] sm:$0xff]
    %v224 = vld [vmem:[#allocation5 + $0x498] sm:$0xff]
    %v225 = vld [vmem:[#allocation5 + $0x4a0] sm:$0xff]
    %v226 = vld [vmem:[#allocation5 + $0x4a8] sm:$0xff]
    %v227 = vld [vmem:[#allocation5 + $0x4b0] sm:$0xff]
    %v228 = vld [vmem:[#allocation5 + $0x4b8] sm:$0xff]
    %v229 = vld [vmem:[#allocation5 + $0x4c0] sm:$0xff]
    %v230 = vld [vmem:[#allocation5 + $0x4c8] sm:$0xff]
    %v231 = vld [vmem:[#allocation5 + $0x4d0] sm:$0xff]
    %v232 = vld [vmem:[#allocation5 + $0x4d8] sm:$0xff]
    %v233 = vld [vmem:[#allocation5 + $0x4e0] sm:$0xff]
    %v234 = vld [vmem:[#allocation5 + $0x4e8] sm:$0xff]
    %v235 = vld [vmem:[#allocation5 + $0x4f0] sm:$0xff]
    %v236 = vld [vmem:[#allocation5 + $0x4f8] sm:$0xff]
    %v237 = vld [vmem:[#allocation5 + $0x500] sm:$0xff]
    %v238 = vld [vmem:[#allocation5 + $0x508] sm:$0xff]
    %v239 = vld [vmem:[#allocation5 + $0x510] sm:$0xff]
    %v240 = vld [vmem:[#allocation5 + $0x518] sm:$0xff]
    %v241 = vld [vmem:[#allocation5 + $0x520] sm:$0xff]
    %v242 = vld [vmem:[#allocation5 + $0x528] sm:$0xff]
    %v243 = vld [vmem:[#allocation5 + $0x530] sm:$0xff]
    %v244 = vld [vmem:[#allocation5 + $0x538] sm:$0xff]
    %v245 = vld [vmem:[#allocation5 + $0x540] sm:$0xff]
    %v246 = vld [vmem:[#allocation5 + $0x548] sm:$0xff]
    %v247 = vld [vmem:[#allocation5 + $0x550] sm:$0xff]
    %v248 = vld [vmem:[#allocation5 + $0x558] sm:$0xff]
    %v249 = vld [vmem:[#allocation5 + $0x560] sm:$0xff]
    %v250 = vld [vmem:[#allocation5 + $0x568] sm:$0xff]
    %v251 = vld [vmem:[#allocation5 + $0x570] sm:$0xff]
    %v252 = vld [vmem:[#allocation5 + $0x578] sm:$0xff]
    %v253 = vld [vmem:[#allocation5 + $0x580] sm:$0xff]
    %v254 = vld [vmem:[#allocation5 + $0x588] sm:$0xff]
    %v255 = vld [vmem:[#allocation5 + $0x590] sm:$0xff]
    %v256 = vld [vmem:[#allocation5 + $0x598] sm:$0xff]
    %v257 = vld [vmem:[#allocation5 + $0x5a0] sm:$0xff]
    %v258 = vld [vmem:[#allocation5 + $0x5a8] sm:$0xff]
    %v259 = vld [vmem:[#allocation5 + $0x5b0] sm:$0xff]
    %v260 = vld [vmem:[#allocation5 + $0x5b8] sm:$0xff]
    %v261 = vld [vmem:[#allocation5 + $0x5c0] sm:$0xff]
    %v262 = vld [vmem:[#allocation5 + $0x5c8] sm:$0xff]
    %v263 = vld [vmem:[#allocation5 + $0x5d0] sm:$0xff]
    %v264 = vld [vmem:[#allocation5 + $0x5d8] sm:$0xff]
    %v265 = vld [vmem:[#allocation5 + $0x5e0] sm:$0xff]
    %v266 = vld [vmem:[#allocation5 + $0x5e8] sm:$0xff]
    %v267 = vld [vmem:[#allocation5 + $0x5f0] sm:$0xff]
    %v268 = vld [vmem:[#allocation5 + $0x5f8] sm:$0xff]
    %v269 = vld [vmem:[#allocation5 + $0x600] sm:$0xff]
    %v270 = vld [vmem:[#allocation5 + $0x608] sm:$0xff]
    %v271 = vld [vmem:[#allocation5 + $0x610] sm:$0xff]
    %v272 = vld [vmem:[#allocation5 + $0x618] sm:$0xff]
    %v273 = vld [vmem:[#allocation5 + $0x620] sm:$0xff]
    %v274 = vld [vmem:[#allocation5 + $0x628] sm:$0xff]
    %v275 = vld [vmem:[#allocation5 + $0x630] sm:$0xff]
    %v276 = vld [vmem:[#allocation5 + $0x638] sm:$0xff]
    %v277 = vld [vmem:[#allocation5 + $0x640] sm:$0xff]
    %v278 = vld [vmem:[#allocation5 + $0x648] sm:$0xff]
    %v279 = vld [vmem:[#allocation5 + $0x650] sm:$0xff]
    %v280 = vld [vmem:[#allocation5 + $0x658] sm:$0xff]
    %v281 = vld [vmem:[#allocation5 + $0x660] sm:$0xff]
    %v282 = vld [vmem:[#allocation5 + $0x668] sm:$0xff]
    %v283 = vld [vmem:[#allocation5 + $0x670] sm:$0xff]
    %v284 = vld [vmem:[#allocation5 + $0x678] sm:$0xff]
    %v285 = vld [vmem:[#allocation5 + $0x680] sm:$0xff]
    %v286 = vld [vmem:[#allocation5 + $0x688] sm:$0xff]
    %v287 = vld [vmem:[#allocation5 + $0x690] sm:$0xff]
    %v288 = vld [vmem:[#allocation5 + $0x698] sm:$0xff]
    %v289 = vld [vmem:[#allocation5 + $0x6a0] sm:$0xff]
    %v290 = vld [vmem:[#allocation5 + $0x6a8] sm:$0xff]
    %v291 = vld [vmem:[#allocation5 + $0x6b0] sm:$0xff]
    %v292 = vld [vmem:[#allocation5 + $0x6b8] sm:$0xff]
    %v293 = vld [vmem:[#allocation5 + $0x6c0] sm:$0xff]
    %v294 = vld [vmem:[#allocation5 + $0x6c8] sm:$0xff]
    %v295 = vld [vmem:[#allocation5 + $0x6d0] sm:$0xff]
    %v296 = vld [vmem:[#allocation5 + $0x6d8] sm:$0xff]
    %v297 = vld [vmem:[#allocation5 + $0x6e0] sm:$0xff]
    %v298 = vld [vmem:[#allocation5 + $0x6e8] sm:$0xff]
    %v299 = vld [vmem:[#allocation5 + $0x6f0] sm:$0xff]
    %v300 = vld [vmem:[#allocation5 + $0x6f8] sm:$0xff]
    %v301 = vld [vmem:[#allocation7] sm:$0xf]
    %v303 = vlaneseq
    %v304 = vshrl.u32 %v303, 7
    %v305 = vsub.s32 0, %v304
    %v306 = vrot.slane %v301, %v305
    %v307 = vlaneseq
    %v308 = vshrl.u32 %v307, 7
    %v309 = vsub.s32 1, %v308
    %v310 = vrot.slane %v301, %v309
    %v311 = vlaneseq
    %v312 = vshrl.u32 %v311, 7
    %v313 = vsub.s32 2, %v312
    %v314 = vrot.slane %v301, %v313
    %v315 = vlaneseq
    %v316 = vshrl.u32 %v315, 7
    %v317 = vsub.s32 3, %v316
    %v318 = vrot.slane %v301, %v317
    %v327 = vunpack.c.l.b16 %v73
    %v328 = vunpack.c.h.b16 %v73
    %v329 = vunpack.c.l.b16 %v74
    %v330 = vunpack.c.h.b16 %v74
    %v331 = vunpack.c.l.b16 %v75
    %v332 = vunpack.c.h.b16 %v75
    %v333 = vunpack.c.l.b16 %v76
    %v334 = vpack.c.b16 %v327, %v327
    %v335 = vpack.c.b16 %v328, %v328
    %v336 = vpack.c.b16 %v329, %v329
    %v337 = vpack.c.b16 %v330, %v330
    %v338 = vpack.c.b16 %v331, %v331
    %v339 = vpack.c.b16 %v332, %v332
    %v340 = vpack.c.b16 %v333, %v333
    %v572 = vunpack.c.l.b16 %v77
    %v573 = vunpack.c.h.b16 %v77
    %v574 = vunpack.c.l.b16 %v78
    %v575 = vunpack.c.h.b16 %v78
    %v576 = vunpack.c.l.b16 %v79
    %v577 = vunpack.c.h.b16 %v79
    %v578 = vunpack.c.l.b16 %v80
    %v579 = vunpack.c.h.b16 %v80
    %v580 = vunpack.c.l.b16 %v81
    %v581 = vunpack.c.h.b16 %v81
    %v582 = vunpack.c.l.b16 %v82
    %v583 = vunpack.c.h.b16 %v82
    %v584 = vunpack.c.l.b16 %v83
    %v585 = vunpack.c.h.b16 %v83
    %v586 = vunpack.c.l.b16 %v84
    %v587 = vunpack.c.h.b16 %v84
    %v588 = vunpack.c.l.b16 %v85
    %v589 = vunpack.c.h.b16 %v85
    %v590 = vunpack.c.l.b16 %v86
    %v591 = vunpack.c.h.b16 %v86
    %v592 = vunpack.c.l.b16 %v87
    %v593 = vunpack.c.h.b16 %v87
    %v594 = vunpack.c.l.b16 %v88
    %v595 = vunpack.c.h.b16 %v88
    %v596 = vunpack.c.l.b16 %v89
    %v597 = vunpack.c.h.b16 %v89
    %v598 = vunpack.c.l.b16 %v90
    %v599 = vunpack.c.h.b16 %v90
    %v600 = vunpack.c.l.b16 %v91
    %v601 = vunpack.c.h.b16 %v91
    %v602 = vunpack.c.l.b16 %v92
    %v603 = vunpack.c.h.b16 %v92
    %v604 = vunpack.c.l.b16 %v93
    %v605 = vunpack.c.h.b16 %v93
    %v606 = vunpack.c.l.b16 %v94
    %v607 = vunpack.c.h.b16 %v94
    %v608 = vunpack.c.l.b16 %v95
    %v609 = vunpack.c.h.b16 %v95
    %v610 = vunpack.c.l.b16 %v96
    %v611 = vunpack.c.h.b16 %v96
    %v612 = vunpack.c.l.b16 %v97
    %v613 = vunpack.c.h.b16 %v97
    %v614 = vunpack.c.l.b16 %v98
    %v615 = vunpack.c.h.b16 %v98
    %v616 = vunpack.c.l.b16 %v99
    %v617 = vunpack.c.h.b16 %v99
    %v618 = vunpack.c.l.b16 %v100
    %v619 = vunpack.c.h.b16 %v100
    %v620 = vunpack.c.l.b16 %v101
    %v621 = vunpack.c.h.b16 %v101
    %v622 = vunpack.c.l.b16 %v102
    %v623 = vunpack.c.h.b16 %v102
    %v624 = vunpack.c.l.b16 %v103
    %v625 = vunpack.c.h.b16 %v103
    %v626 = vunpack.c.l.b16 %v104
    %v627 = vunpack.c.h.b16 %v104
    %v628 = vunpack.c.l.b16 %v105
    %v629 = vunpack.c.h.b16 %v105
    %v630 = vunpack.c.l.b16 %v106
    %v631 = vunpack.c.h.b16 %v106
    %v632 = vunpack.c.l.b16 %v107
    %v633 = vunpack.c.h.b16 %v107
    %v634 = vunpack.c.l.b16 %v108
    %v635 = vunpack.c.h.b16 %v108
    %v636 = vunpack.c.l.b16 %v109
    %v637 = vunpack.c.h.b16 %v109
    %v638 = vunpack.c.l.b16 %v110
    %v639 = vunpack.c.h.b16 %v110
    %v640 = vunpack.c.l.b16 %v111
    %v641 = vunpack.c.h.b16 %v111
    %v642 = vunpack.c.l.b16 %v112
    %v643 = vunpack.c.h.b16 %v112
    %v644 = vunpack.c.l.b16 %v113
    %v645 = vunpack.c.h.b16 %v113
    %v646 = vunpack.c.l.b16 %v114
    %v647 = vunpack.c.h.b16 %v114
    %v648 = vunpack.c.l.b16 %v115
    %v649 = vunpack.c.h.b16 %v115
    %v650 = vunpack.c.l.b16 %v116
    %v651 = vunpack.c.h.b16 %v116
    %v652 = vunpack.c.l.b16 %v117
    %v653 = vunpack.c.h.b16 %v117
    %v654 = vunpack.c.l.b16 %v118
    %v655 = vunpack.c.h.b16 %v118
    %v656 = vunpack.c.l.b16 %v119
    %v657 = vunpack.c.h.b16 %v119
    %v658 = vunpack.c.l.b16 %v120
    %v659 = vunpack.c.h.b16 %v120
    %v660 = vunpack.c.l.b16 %v121
    %v661 = vunpack.c.h.b16 %v121
    %v662 = vunpack.c.l.b16 %v122
    %v663 = vunpack.c.h.b16 %v122
    %v664 = vunpack.c.l.b16 %v123
    %v665 = vunpack.c.h.b16 %v123
    %v666 = vunpack.c.l.b16 %v124
    %v667 = vunpack.c.h.b16 %v124
    %v668 = vunpack.c.l.b16 %v125
    %v669 = vunpack.c.h.b16 %v125
    %v670 = vunpack.c.l.b16 %v126
    %v671 = vunpack.c.h.b16 %v126
    %v672 = vunpack.c.l.b16 %v127
    %v673 = vunpack.c.h.b16 %v127
    %v674 = vunpack.c.l.b16 %v128
    %v675 = vunpack.c.h.b16 %v128
    %v676 = vunpack.c.l.b16 %v129
    %v677 = vunpack.c.h.b16 %v129
    %v678 = vunpack.c.l.b16 %v130
    %v679 = vunpack.c.h.b16 %v130
    %v680 = vunpack.c.l.b16 %v131
    %v681 = vunpack.c.h.b16 %v131
    %v682 = vunpack.c.l.b16 %v132
    %v683 = vunpack.c.h.b16 %v132
    %v684 = vunpack.c.l.b16 %v133
    %v685 = vunpack.c.h.b16 %v133
    %v686 = vunpack.c.l.b16 %v134
    %v687 = vunpack.c.h.b16 %v134
    %v688 = vunpack.c.l.b16 %v135
    %v689 = vunpack.c.h.b16 %v135
    %v690 = vunpack.c.l.b16 %v136
    %v691 = vunpack.c.h.b16 %v136
    %v692 = vunpack.c.l.b16 %v137
    %v693 = vunpack.c.h.b16 %v137
    %v694 = vunpack.c.l.b16 %v138
    %v695 = vunpack.c.h.b16 %v138
    %v696 = vunpack.c.l.b16 %v139
    %v697 = vunpack.c.h.b16 %v139
    %v698 = vunpack.c.l.b16 %v140
    %v699 = vunpack.c.h.b16 %v140
    %v700 = vunpack.c.l.b16 %v141
    %v701 = vunpack.c.h.b16 %v141
    %v702 = vunpack.c.l.b16 %v142
    %v703 = vunpack.c.h.b16 %v142
    %v704 = vunpack.c.l.b16 %v143
    %v705 = vunpack.c.h.b16 %v143
    %v706 = vunpack.c.l.b16 %v144
    %v707 = vunpack.c.h.b16 %v144
    %v708 = vunpack.c.l.b16 %v145
    %v709 = vunpack.c.h.b16 %v145
    %v710 = vunpack.c.l.b16 %v146
    %v711 = vunpack.c.h.b16 %v146
    %v712 = vunpack.c.l.b16 %v147
    %v713 = vunpack.c.h.b16 %v147
    %v714 = vunpack.c.l.b16 %v148
    %v715 = vunpack.c.h.b16 %v148
    %v716 = vunpack.c.l.b16 %v149
    %v717 = vunpack.c.h.b16 %v149
    %v718 = vunpack.c.l.b16 %v150
    %v719 = vunpack.c.h.b16 %v150
    %v720 = vunpack.c.l.b16 %v151
    %v721 = vunpack.c.h.b16 %v151
    %v722 = vunpack.c.l.b16 %v152
    %v723 = vunpack.c.h.b16 %v152
    %v724 = vunpack.c.l.b16 %v153
    %v725 = vunpack.c.h.b16 %v153
    %v726 = vunpack.c.l.b16 %v154
    %v727 = vunpack.c.h.b16 %v154
    %v728 = vunpack.c.l.b16 %v155
    %v729 = vunpack.c.h.b16 %v155
    %v730 = vunpack.c.l.b16 %v156
    %v731 = vunpack.c.h.b16 %v156
    %v732 = vunpack.c.l.b16 %v157
    %v733 = vunpack.c.h.b16 %v157
    %v734 = vunpack.c.l.b16 %v158
    %v735 = vunpack.c.h.b16 %v158
    %v736 = vunpack.c.l.b16 %v159
    %v737 = vunpack.c.h.b16 %v159
    %v738 = vunpack.c.l.b16 %v160
    %v739 = vunpack.c.h.b16 %v160
    %v740 = vunpack.c.l.b16 %v161
    %v741 = vunpack.c.h.b16 %v161
    %v742 = vunpack.c.l.b16 %v162
    %v743 = vunpack.c.h.b16 %v162
    %v744 = vunpack.c.l.b16 %v163
    %v745 = vunpack.c.h.b16 %v163
    %v746 = vunpack.c.l.b16 %v164
    %v747 = vunpack.c.h.b16 %v164
    %v748 = vunpack.c.l.b16 %v165
    %v749 = vunpack.c.h.b16 %v165
    %v750 = vunpack.c.l.b16 %v166
    %v751 = vunpack.c.h.b16 %v166
    %v752 = vunpack.c.l.b16 %v167
    %v753 = vunpack.c.h.b16 %v167
    %v754 = vunpack.c.l.b16 %v168
    %v755 = vunpack.c.h.b16 %v168
    %v756 = vunpack.c.l.b16 %v169
    %v757 = vunpack.c.h.b16 %v169
    %v758 = vunpack.c.l.b16 %v170
    %v759 = vunpack.c.h.b16 %v170
    %v760 = vunpack.c.l.b16 %v171
    %v761 = vunpack.c.h.b16 %v171
    %v762 = vunpack.c.l.b16 %v172
    %v763 = vunpack.c.h.b16 %v172
    %v764 = vunpack.c.l.b16 %v173
    %v765 = vunpack.c.h.b16 %v173
    %v766 = vunpack.c.l.b16 %v174
    %v767 = vunpack.c.h.b16 %v174
    %v768 = vunpack.c.l.b16 %v175
    %v769 = vunpack.c.h.b16 %v175
    %v770 = vunpack.c.l.b16 %v176
    %v771 = vunpack.c.h.b16 %v176
    %v772 = vunpack.c.l.b16 %v177
    %v773 = vunpack.c.h.b16 %v177
    %v774 = vunpack.c.l.b16 %v178
    %v775 = vunpack.c.h.b16 %v178
    %v776 = vunpack.c.l.b16 %v179
    %v777 = vunpack.c.h.b16 %v179
    %v778 = vunpack.c.l.b16 %v180
    %v779 = vunpack.c.h.b16 %v180
    %v780 = vunpack.c.l.b16 %v181
    %v781 = vunpack.c.h.b16 %v181
    %v782 = vunpack.c.l.b16 %v182
    %v783 = vunpack.c.h.b16 %v182
    %v784 = vunpack.c.l.b16 %v183
    %v785 = vunpack.c.h.b16 %v183
    %v786 = vunpack.c.l.b16 %v184
    %v787 = vunpack.c.h.b16 %v184
    %v788 = vunpack.c.l.b16 %v185
    %v789 = vunpack.c.h.b16 %v185
    %v790 = vunpack.c.l.b16 %v186
    %v791 = vunpack.c.h.b16 %v186
    %v792 = vunpack.c.l.b16 %v187
    %v793 = vunpack.c.h.b16 %v187
    %v794 = vunpack.c.l.b16 %v188
    %v795 = vunpack.c.h.b16 %v188
    %v796 = vunpack.c.l.b16 %v189
    %v797 = vunpack.c.h.b16 %v189
    %v798 = vunpack.c.l.b16 %v190
    %v799 = vunpack.c.h.b16 %v190
    %v800 = vunpack.c.l.b16 %v191
    %v801 = vunpack.c.h.b16 %v191
    %v802 = vunpack.c.l.b16 %v192
    %v803 = vunpack.c.h.b16 %v192
    %v804 = vunpack.c.l.b16 %v193
    %v805 = vunpack.c.h.b16 %v193
    %v806 = vunpack.c.l.b16 %v194
    %v807 = vunpack.c.h.b16 %v194
    %v808 = vunpack.c.l.b16 %v195
    %v809 = vunpack.c.h.b16 %v195
    %v810 = vunpack.c.l.b16 %v196
    %v811 = vunpack.c.h.b16 %v196
    %v812 = vunpack.c.l.b16 %v197
    %v813 = vunpack.c.h.b16 %v197
    %v814 = vunpack.c.l.b16 %v198
    %v815 = vunpack.c.h.b16 %v198
    %v816 = vunpack.c.l.b16 %v199
    %v817 = vunpack.c.h.b16 %v199
    %v818 = vunpack.c.l.b16 %v200
    %v819 = vunpack.c.h.b16 %v200
    %v820 = vunpack.c.l.b16 %v201
    %v821 = vunpack.c.h.b16 %v201
    %v822 = vunpack.c.l.b16 %v202
    %v823 = vunpack.c.h.b16 %v202
    %v824 = vunpack.c.l.b16 %v203
    %v825 = vunpack.c.h.b16 %v203
    %v826 = vunpack.c.l.b16 %v204
    %v827 = vunpack.c.h.b16 %v204
    %v828 = vunpack.c.l.b16 %v205
    %v829 = vunpack.c.h.b16 %v205
    %v830 = vunpack.c.l.b16 %v206
    %v831 = vunpack.c.h.b16 %v206
    %v832 = vunpack.c.l.b16 %v207
    %v833 = vunpack.c.h.b16 %v207
    %v834 = vunpack.c.l.b16 %v208
    %v835 = vunpack.c.h.b16 %v208
    %v836 = vunpack.c.l.b16 %v209
    %v837 = vunpack.c.h.b16 %v209
    %v838 = vunpack.c.l.b16 %v210
    %v839 = vunpack.c.h.b16 %v210
    %v840 = vunpack.c.l.b16 %v211
    %v841 = vunpack.c.h.b16 %v211
    %v842 = vunpack.c.l.b16 %v212
    %v843 = vunpack.c.h.b16 %v212
    %v844 = vunpack.c.l.b16 %v213
    %v845 = vunpack.c.h.b16 %v213
    %v846 = vunpack.c.l.b16 %v214
    %v847 = vunpack.c.h.b16 %v214
    %v848 = vunpack.c.l.b16 %v215
    %v849 = vunpack.c.h.b16 %v215
    %v850 = vunpack.c.l.b16 %v216
    %v851 = vunpack.c.h.b16 %v216
    %v852 = vunpack.c.l.b16 %v217
    %v853 = vunpack.c.h.b16 %v217
    %v854 = vunpack.c.l.b16 %v218
    %v855 = vunpack.c.h.b16 %v218
    %v856 = vunpack.c.l.b16 %v219
    %v857 = vunpack.c.h.b16 %v219
    %v858 = vunpack.c.l.b16 %v220
    %v859 = vunpack.c.h.b16 %v220
    %v860 = vunpack.c.l.b16 %v221
    %v861 = vunpack.c.h.b16 %v221
    %v862 = vunpack.c.l.b16 %v222
    %v863 = vunpack.c.h.b16 %v222
    %v864 = vunpack.c.l.b16 %v223
    %v865 = vunpack.c.h.b16 %v223
    %v866 = vunpack.c.l.b16 %v224
    %v867 = vunpack.c.h.b16 %v224
    %v868 = vunpack.c.l.b16 %v225
    %v869 = vunpack.c.h.b16 %v225
    %v870 = vunpack.c.l.b16 %v226
    %v871 = vunpack.c.h.b16 %v226
    %v872 = vunpack.c.l.b16 %v227
    %v873 = vunpack.c.h.b16 %v227
    %v874 = vunpack.c.l.b16 %v228
    %v875 = vunpack.c.h.b16 %v228
    %v876 = vunpack.c.l.b16 %v229
    %v877 = vunpack.c.h.b16 %v229
    %v878 = vunpack.c.l.b16 %v230
    %v879 = vunpack.c.h.b16 %v230
    %v880 = vunpack.c.l.b16 %v231
    %v881 = vunpack.c.h.b16 %v231
    %v882 = vunpack.c.l.b16 %v232
    %v883 = vunpack.c.h.b16 %v232
    %v884 = vunpack.c.l.b16 %v233
    %v885 = vunpack.c.h.b16 %v233
    %v886 = vunpack.c.l.b16 %v234
    %v887 = vunpack.c.h.b16 %v234
    %v888 = vunpack.c.l.b16 %v235
    %v889 = vunpack.c.h.b16 %v235
    %v890 = vunpack.c.l.b16 %v236
    %v891 = vunpack.c.h.b16 %v236
    %v892 = vunpack.c.l.b16 %v237
    %v893 = vunpack.c.h.b16 %v237
    %v894 = vunpack.c.l.b16 %v238
    %v895 = vunpack.c.h.b16 %v238
    %v896 = vunpack.c.l.b16 %v239
    %v897 = vunpack.c.h.b16 %v239
    %v898 = vunpack.c.l.b16 %v240
    %v899 = vunpack.c.h.b16 %v240
    %v900 = vunpack.c.l.b16 %v241
    %v901 = vunpack.c.h.b16 %v241
    %v902 = vunpack.c.l.b16 %v242
    %v903 = vunpack.c.h.b16 %v242
    %v904 = vunpack.c.l.b16 %v243
    %v905 = vunpack.c.h.b16 %v243
    %v906 = vunpack.c.l.b16 %v244
    %v907 = vunpack.c.h.b16 %v244
    %v908 = vunpack.c.l.b16 %v245
    %v909 = vunpack.c.h.b16 %v245
    %v910 = vunpack.c.l.b16 %v246
    %v911 = vunpack.c.h.b16 %v246
    %v912 = vunpack.c.l.b16 %v247
    %v913 = vunpack.c.h.b16 %v247
    %v914 = vunpack.c.l.b16 %v248
    %v915 = vunpack.c.h.b16 %v248
    %v916 = vunpack.c.l.b16 %v249
    %v917 = vunpack.c.h.b16 %v249
    %v918 = vunpack.c.l.b16 %v250
    %v919 = vunpack.c.h.b16 %v250
    %v920 = vunpack.c.l.b16 %v251
    %v921 = vunpack.c.h.b16 %v251
    %v922 = vunpack.c.l.b16 %v252
    %v923 = vunpack.c.h.b16 %v252
    %v924 = vunpack.c.l.b16 %v253
    %v925 = vunpack.c.h.b16 %v253
    %v926 = vunpack.c.l.b16 %v254
    %v927 = vunpack.c.h.b16 %v254
    %v928 = vunpack.c.l.b16 %v255
    %v929 = vunpack.c.h.b16 %v255
    %v930 = vunpack.c.l.b16 %v256
    %v931 = vunpack.c.h.b16 %v256
    %v932 = vunpack.c.l.b16 %v257
    %v933 = vunpack.c.h.b16 %v257
    %v934 = vunpack.c.l.b16 %v258
    %v935 = vunpack.c.h.b16 %v258
    %v936 = vunpack.c.l.b16 %v259
    %v937 = vunpack.c.h.b16 %v259
    %v938 = vunpack.c.l.b16 %v260
    %v939 = vunpack.c.h.b16 %v260
    %v940 = vunpack.c.l.b16 %v261
    %v941 = vunpack.c.h.b16 %v261
    %v942 = vunpack.c.l.b16 %v262
    %v943 = vunpack.c.h.b16 %v262
    %v944 = vunpack.c.l.b16 %v263
    %v945 = vunpack.c.h.b16 %v263
    %v946 = vunpack.c.l.b16 %v264
    %v947 = vunpack.c.h.b16 %v264
    %v948 = vunpack.c.l.b16 %v265
    %v949 = vunpack.c.h.b16 %v265
    %v950 = vunpack.c.l.b16 %v266
    %v951 = vunpack.c.h.b16 %v266
    %v952 = vunpack.c.l.b16 %v267
    %v953 = vunpack.c.h.b16 %v267
    %v954 = vunpack.c.l.b16 %v268
    %v955 = vunpack.c.h.b16 %v268
    %v956 = vunpack.c.l.b16 %v269
    %v957 = vunpack.c.h.b16 %v269
    %v958 = vunpack.c.l.b16 %v270
    %v959 = vunpack.c.h.b16 %v270
    %v960 = vunpack.c.l.b16 %v271
    %v961 = vunpack.c.h.b16 %v271
    %v962 = vunpack.c.l.b16 %v272
    %v963 = vunpack.c.h.b16 %v272
    %v964 = vunpack.c.l.b16 %v273
    %v965 = vunpack.c.h.b16 %v273
    %v966 = vunpack.c.l.b16 %v274
    %v967 = vunpack.c.h.b16 %v274
    %v968 = vunpack.c.l.b16 %v275
    %v969 = vunpack.c.h.b16 %v275
    %v970 = vunpack.c.l.b16 %v276
    %v971 = vunpack.c.h.b16 %v276
    %v972 = vunpack.c.l.b16 %v277
    %v973 = vunpack.c.h.b16 %v277
    %v974 = vunpack.c.l.b16 %v278
    %v975 = vunpack.c.h.b16 %v278
    %v976 = vunpack.c.l.b16 %v279
    %v977 = vunpack.c.h.b16 %v279
    %v978 = vunpack.c.l.b16 %v280
    %v979 = vunpack.c.h.b16 %v280
    %v980 = vunpack.c.l.b16 %v281
    %v981 = vunpack.c.h.b16 %v281
    %v982 = vunpack.c.l.b16 %v282
    %v983 = vunpack.c.h.b16 %v282
    %v984 = vunpack.c.l.b16 %v283
    %v985 = vunpack.c.h.b16 %v283
    %v986 = vunpack.c.l.b16 %v284
    %v987 = vunpack.c.h.b16 %v284
    %v988 = vunpack.c.l.b16 %v285
    %v989 = vunpack.c.h.b16 %v285
    %v990 = vunpack.c.l.b16 %v286
    %v991 = vunpack.c.h.b16 %v286
    %v992 = vunpack.c.l.b16 %v287
    %v993 = vunpack.c.h.b16 %v287
    %v994 = vunpack.c.l.b16 %v288
    %v995 = vunpack.c.h.b16 %v288
    %v996 = vunpack.c.l.b16 %v289
    %v997 = vunpack.c.h.b16 %v289
    %v998 = vunpack.c.l.b16 %v290
    %v999 = vunpack.c.h.b16 %v290
    %v1000 = vunpack.c.l.b16 %v291
    %v1001 = vunpack.c.h.b16 %v291
    %v1002 = vunpack.c.l.b16 %v292
    %v1003 = vunpack.c.h.b16 %v292
    %v1004 = vunpack.c.l.b16 %v293
    %v1005 = vunpack.c.h.b16 %v293
    %v1006 = vunpack.c.l.b16 %v294
    %v1007 = vunpack.c.h.b16 %v294
    %v1008 = vunpack.c.l.b16 %v295
    %v1009 = vunpack.c.h.b16 %v295
    %v1010 = vunpack.c.l.b16 %v296
    %v1011 = vunpack.c.h.b16 %v296
    %v1012 = vunpack.c.l.b16 %v297
    %v1013 = vunpack.c.h.b16 %v297
    %v1014 = vunpack.c.l.b16 %v298
    %v1015 = vunpack.c.h.b16 %v298
    %v1016 = vunpack.c.l.b16 %v299
    %v1017 = vunpack.c.h.b16 %v299
    %v1018 = vunpack.c.l.b16 %v300
    %v1019 = vunpack.c.h.b16 %v300
    %v1020 = vpack.c.b16 %v576, %v572
    %v1021 = vpack.c.b16 %v577, %v573
    %v1022 = vpack.c.b16 %v578, %v574
    %v1023 = vpack.c.b16 %v579, %v575
    %v1024 = vpack.c.b16 %v584, %v580
    %v1025 = vpack.c.b16 %v585, %v581
    %v1026 = vpack.c.b16 %v586, %v582
    %v1027 = vpack.c.b16 %v587, %v583
    %v1028 = vpack.c.b16 %v592, %v588
    %v1029 = vpack.c.b16 %v593, %v589
    %v1030 = vpack.c.b16 %v594, %v590
    %v1031 = vpack.c.b16 %v595, %v591
    %v1032 = vpack.c.b16 %v600, %v596
    %v1033 = vpack.c.b16 %v601, %v597
    %v1034 = vpack.c.b16 %v602, %v598
    %v1035 = vpack.c.b16 %v603, %v599
    %v1036 = vpack.c.b16 %v608, %v604
    %v1037 = vpack.c.b16 %v609, %v605
    %v1038 = vpack.c.b16 %v610, %v606
    %v1039 = vpack.c.b16 %v611, %v607
    %v1040 = vpack.c.b16 %v616, %v612
    %v1041 = vpack.c.b16 %v617, %v613
    %v1042 = vpack.c.b16 %v618, %v614
    %v1043 = vpack.c.b16 %v619, %v615
    %v1044 = vpack.c.b16 %v624, %v620
    %v1045 = vpack.c.b16 %v625, %v621
    %v1046 = vpack.c.b16 %v626, %v622
    %v1047 = vpack.c.b16 %v627, %v623
    %v1048 = vpack.c.b16 %v632, %v628
    %v1049 = vpack.c.b16 %v633, %v629
    %v1050 = vpack.c.b16 %v634, %v630
    %v1051 = vpack.c.b16 %v635, %v631
    %v1052 = vpack.c.b16 %v640, %v636
    %v1053 = vpack.c.b16 %v641, %v637
    %v1054 = vpack.c.b16 %v642, %v638
    %v1055 = vpack.c.b16 %v643, %v639
    %v1056 = vpack.c.b16 %v648, %v644
    %v1057 = vpack.c.b16 %v649, %v645
    %v1058 = vpack.c.b16 %v650, %v646
    %v1059 = vpack.c.b16 %v651, %v647
    %v1060 = vpack.c.b16 %v656, %v652
    %v1061 = vpack.c.b16 %v657, %v653
    %v1062 = vpack.c.b16 %v658, %v654
    %v1063 = vpack.c.b16 %v659, %v655
    %v1064 = vpack.c.b16 %v664, %v660
    %v1065 = vpack.c.b16 %v665, %v661
    %v1066 = vpack.c.b16 %v666, %v662
    %v1067 = vpack.c.b16 %v667, %v663
    %v1068 = vpack.c.b16 %v672, %v668
    %v1069 = vpack.c.b16 %v673, %v669
    %v1070 = vpack.c.b16 %v674, %v670
    %v1071 = vpack.c.b16 %v675, %v671
    %v1072 = vpack.c.b16 %v680, %v676
    %v1073 = vpack.c.b16 %v681, %v677
    %v1074 = vpack.c.b16 %v682, %v678
    %v1075 = vpack.c.b16 %v683, %v679
    %v1076 = vpack.c.b16 %v688, %v684
    %v1077 = vpack.c.b16 %v689, %v685
    %v1078 = vpack.c.b16 %v690, %v686
    %v1079 = vpack.c.b16 %v691, %v687
    %v1080 = vpack.c.b16 %v696, %v692
    %v1081 = vpack.c.b16 %v697, %v693
    %v1082 = vpack.c.b16 %v698, %v694
    %v1083 = vpack.c.b16 %v699, %v695
    %v1084 = vpack.c.b16 %v704, %v700
    %v1085 = vpack.c.b16 %v705, %v701
    %v1086 = vpack.c.b16 %v706, %v702
    %v1087 = vpack.c.b16 %v707, %v703
    %v1088 = vpack.c.b16 %v712, %v708
    %v1089 = vpack.c.b16 %v713, %v709
    %v1090 = vpack.c.b16 %v714, %v710
    %v1091 = vpack.c.b16 %v715, %v711
    %v1092 = vpack.c.b16 %v720, %v716
    %v1093 = vpack.c.b16 %v721, %v717
    %v1094 = vpack.c.b16 %v722, %v718
    %v1095 = vpack.c.b16 %v723, %v719
    %v1096 = vpack.c.b16 %v728, %v724
    %v1097 = vpack.c.b16 %v729, %v725
    %v1098 = vpack.c.b16 %v730, %v726
    %v1099 = vpack.c.b16 %v731, %v727
    %v1100 = vpack.c.b16 %v736, %v732
    %v1101 = vpack.c.b16 %v737, %v733
    %v1102 = vpack.c.b16 %v738, %v734
    %v1103 = vpack.c.b16 %v739, %v735
    %v1104 = vpack.c.b16 %v744, %v740
    %v1105 = vpack.c.b16 %v745, %v741
    %v1106 = vpack.c.b16 %v746, %v742
    %v1107 = vpack.c.b16 %v747, %v743
    %v1108 = vpack.c.b16 %v752, %v748
    %v1109 = vpack.c.b16 %v753, %v749
    %v1110 = vpack.c.b16 %v754, %v750
    %v1111 = vpack.c.b16 %v755, %v751
    %v1112 = vpack.c.b16 %v760, %v756
    %v1113 = vpack.c.b16 %v761, %v757
    %v1114 = vpack.c.b16 %v762, %v758
    %v1115 = vpack.c.b16 %v763, %v759
    %v1116 = vpack.c.b16 %v768, %v764
    %v1117 = vpack.c.b16 %v769, %v765
    %v1118 = vpack.c.b16 %v770, %v766
    %v1119 = vpack.c.b16 %v771, %v767
    %v1120 = vpack.c.b16 %v776, %v772
    %v1121 = vpack.c.b16 %v777, %v773
    %v1122 = vpack.c.b16 %v778, %v774
    %v1123 = vpack.c.b16 %v779, %v775
    %v1124 = vpack.c.b16 %v784, %v780
    %v1125 = vpack.c.b16 %v785, %v781
    %v1126 = vpack.c.b16 %v786, %v782
    %v1127 = vpack.c.b16 %v787, %v783
    %v1128 = vpack.c.b16 %v792, %v788
    %v1129 = vpack.c.b16 %v793, %v789
    %v1130 = vpack.c.b16 %v794, %v790
    %v1131 = vpack.c.b16 %v795, %v791
    %v1132 = vpack.c.b16 %v800, %v796
    %v1133 = vpack.c.b16 %v801, %v797
    %v1134 = vpack.c.b16 %v802, %v798
    %v1135 = vpack.c.b16 %v803, %v799
    %v1136 = vpack.c.b16 %v808, %v804
    %v1137 = vpack.c.b16 %v809, %v805
    %v1138 = vpack.c.b16 %v810, %v806
    %v1139 = vpack.c.b16 %v811, %v807
    %v1140 = vpack.c.b16 %v816, %v812
    %v1141 = vpack.c.b16 %v817, %v813
    %v1142 = vpack.c.b16 %v818, %v814
    %v1143 = vpack.c.b16 %v819, %v815
    %v1144 = vpack.c.b16 %v824, %v820
    %v1145 = vpack.c.b16 %v825, %v821
    %v1146 = vpack.c.b16 %v826, %v822
    %v1147 = vpack.c.b16 %v827, %v823
    %v1148 = vpack.c.b16 %v832, %v828
    %v1149 = vpack.c.b16 %v833, %v829
    %v1150 = vpack.c.b16 %v834, %v830
    %v1151 = vpack.c.b16 %v835, %v831
    %v1152 = vpack.c.b16 %v840, %v836
    %v1153 = vpack.c.b16 %v841, %v837
    %v1154 = vpack.c.b16 %v842, %v838
    %v1155 = vpack.c.b16 %v843, %v839
    %v1156 = vpack.c.b16 %v848, %v844
    %v1157 = vpack.c.b16 %v849, %v845
    %v1158 = vpack.c.b16 %v850, %v846
    %v1159 = vpack.c.b16 %v851, %v847
    %v1160 = vpack.c.b16 %v856, %v852
    %v1161 = vpack.c.b16 %v857, %v853
    %v1162 = vpack.c.b16 %v858, %v854
    %v1163 = vpack.c.b16 %v859, %v855
    %v1164 = vpack.c.b16 %v864, %v860
    %v1165 = vpack.c.b16 %v865, %v861
    %v1166 = vpack.c.b16 %v866, %v862
    %v1167 = vpack.c.b16 %v867, %v863
    %v1168 = vpack.c.b16 %v872, %v868
    %v1169 = vpack.c.b16 %v873, %v869
    %v1170 = vpack.c.b16 %v874, %v870
    %v1171 = vpack.c.b16 %v875, %v871
    %v1172 = vpack.c.b16 %v880, %v876
    %v1173 = vpack.c.b16 %v881, %v877
    %v1174 = vpack.c.b16 %v882, %v878
    %v1175 = vpack.c.b16 %v883, %v879
    %v1176 = vpack.c.b16 %v888, %v884
    %v1177 = vpack.c.b16 %v889, %v885
    %v1178 = vpack.c.b16 %v890, %v886
    %v1179 = vpack.c.b16 %v891, %v887
    %v1180 = vpack.c.b16 %v896, %v892
    %v1181 = vpack.c.b16 %v897, %v893
    %v1182 = vpack.c.b16 %v898, %v894
    %v1183 = vpack.c.b16 %v899, %v895
    %v1184 = vpack.c.b16 %v904, %v900
    %v1185 = vpack.c.b16 %v905, %v901
    %v1186 = vpack.c.b16 %v906, %v902
    %v1187 = vpack.c.b16 %v907, %v903
    %v1188 = vpack.c.b16 %v912, %v908
    %v1189 = vpack.c.b16 %v913, %v909
    %v1190 = vpack.c.b16 %v914, %v910
    %v1191 = vpack.c.b16 %v915, %v911
    %v1192 = vpack.c.b16 %v920, %v916
    %v1193 = vpack.c.b16 %v921, %v917
    %v1194 = vpack.c.b16 %v922, %v918
    %v1195 = vpack.c.b16 %v923, %v919
    %v1196 = vpack.c.b16 %v928, %v924
    %v1197 = vpack.c.b16 %v929, %v925
    %v1198 = vpack.c.b16 %v930, %v926
    %v1199 = vpack.c.b16 %v931, %v927
    %v1200 = vpack.c.b16 %v936, %v932
    %v1201 = vpack.c.b16 %v937, %v933
    %v1202 = vpack.c.b16 %v938, %v934
    %v1203 = vpack.c.b16 %v939, %v935
    %v1204 = vpack.c.b16 %v944, %v940
    %v1205 = vpack.c.b16 %v945, %v941
    %v1206 = vpack.c.b16 %v946, %v942
    %v1207 = vpack.c.b16 %v947, %v943
    %v1208 = vpack.c.b16 %v952, %v948
    %v1209 = vpack.c.b16 %v953, %v949
    %v1210 = vpack.c.b16 %v954, %v950
    %v1211 = vpack.c.b16 %v955, %v951
    %v1212 = vpack.c.b16 %v960, %v956
    %v1213 = vpack.c.b16 %v961, %v957
    %v1214 = vpack.c.b16 %v962, %v958
    %v1215 = vpack.c.b16 %v963, %v959
    %v1216 = vpack.c.b16 %v968, %v964
    %v1217 = vpack.c.b16 %v969, %v965
    %v1218 = vpack.c.b16 %v970, %v966
    %v1219 = vpack.c.b16 %v971, %v967
    %v1220 = vpack.c.b16 %v976, %v972
    %v1221 = vpack.c.b16 %v977, %v973
    %v1222 = vpack.c.b16 %v978, %v974
    %v1223 = vpack.c.b16 %v979, %v975
    %v1224 = vpack.c.b16 %v984, %v980
    %v1225 = vpack.c.b16 %v985, %v981
    %v1226 = vpack.c.b16 %v986, %v982
    %v1227 = vpack.c.b16 %v987, %v983
    %v1228 = vpack.c.b16 %v992, %v988
    %v1229 = vpack.c.b16 %v993, %v989
    %v1230 = vpack.c.b16 %v994, %v990
    %v1231 = vpack.c.b16 %v995, %v991
    %v1232 = vpack.c.b16 %v1000, %v996
    %v1233 = vpack.c.b16 %v1001, %v997
    %v1234 = vpack.c.b16 %v1002, %v998
    %v1235 = vpack.c.b16 %v1003, %v999
    %v1236 = vpack.c.b16 %v1008, %v1004
    %v1237 = vpack.c.b16 %v1009, %v1005
    %v1238 = vpack.c.b16 %v1010, %v1006
    %v1239 = vpack.c.b16 %v1011, %v1007
    %v1240 = vpack.c.b16 %v1016, %v1012
    %v1241 = vpack.c.b16 %v1017, %v1013
    %v1242 = vpack.c.b16 %v1018, %v1014
    %v1243 = vpack.c.b16 %v1019, %v1015
    %1468 = vmatprep.subr.bf16.mxu0 %v1049
    %1469 = vmatpush1.bf16.msra.mxu0 %v1048
    %1470 = vmatprep.subr.bf16.mxu0 %v1045
    %1471 = vmatpush1.bf16.msra.mxu0 %v1044
    %1472 = vmatprep.subr.bf16.mxu0 %v1041
    %1473 = vmatpush1.bf16.msra.mxu0 %v1040
    %1474 = vmatprep.subr.bf16.mxu0 %v1037
    %1475 = vmatpush1.bf16.msra.mxu0 %v1036
    %1476 = vmatprep.subr.bf16.mxu0 %v1033
    %1477 = vmatpush1.bf16.msra.mxu0 %v1032
    %1478 = vmatprep.subr.bf16.mxu0 %v1029
    %1479 = vmatpush1.bf16.msra.mxu0 %v1028
    %1480 = vmatprep.subr.bf16.mxu0 %v1025
    %1481 = vmatpush1.bf16.msra.mxu0 %v1024
    %1482 = vmatprep.subr.bf16.mxu0 %v1021
    %1483 = vmatpush1.bf16.msra.mxu0 %v1020
    %1484 = vmatprep.subr.bf16.mxu0 %v1081
    %1485 = vmatpush2.bf16.msra.mxu0 %v1080
    %1486 = vmatprep.subr.bf16.mxu0 %v1077
    %1487 = vmatpush2.bf16.msra.mxu0 %v1076
    %1488 = vmatprep.subr.bf16.mxu0 %v1073
    %1489 = vmatpush2.bf16.msra.mxu0 %v1072
    %1490 = vmatprep.subr.bf16.mxu0 %v1069
    %1491 = vmatpush2.bf16.msra.mxu0 %v1068
    %1492 = vmatprep.subr.bf16.mxu0 %v1065
    %1493 = vmatpush2.bf16.msra.mxu0 %v1064
    %1494 = vmatprep.subr.bf16.mxu0 %v1061
    %1495 = vmatpush2.bf16.msra.mxu0 %v1060
    %1496 = vmatprep.subr.bf16.mxu0 %v1057
    %1497 = vmatpush2.bf16.msra.mxu0 %v1056
    %1498 = vmatprep.subr.bf16.mxu0 %v1053
    %1499 = vmatpush2.bf16.msra.mxu0 %v1052
    %1500 = vmatprep.mubr.bf16.mxu0 %v335
    %1501 = vmatmul.mubr.bf16.gmra.mxu0 %v334
    %v1502 = vpop.f32.mrf.mxu0
    %v1503 = vadd.f32 %v306, %v1502
    %v1504 = vpop.f32.mrf.mxu0
    %v1505 = vadd.f32 %v310, %v1504
    %v1506 = vpop.f32.mrf.mxu0
    %v1507 = vpop.f32.mrf.mxu0
    %1508 = vdwg.mxu0
    %1509 = vmatprep.subr.bf16.mxu0 %v1113
    %1510 = vmatpush1.bf16.msra.mxu0 %v1112
    %1511 = vmatprep.subr.bf16.mxu0 %v1109
    %1512 = vmatpush1.bf16.msra.mxu0 %v1108
    %1513 = vmatprep.subr.bf16.mxu0 %v1105
    %1514 = vmatpush1.bf16.msra.mxu0 %v1104
    %1515 = vmatprep.subr.bf16.mxu0 %v1101
    %1516 = vmatpush1.bf16.msra.mxu0 %v1100
    %1517 = vmatprep.subr.bf16.mxu0 %v1097
    %1518 = vmatpush1.bf16.msra.mxu0 %v1096
    %1519 = vmatprep.subr.bf16.mxu0 %v1093
    %1520 = vmatpush1.bf16.msra.mxu0 %v1092
    %1521 = vmatprep.subr.bf16.mxu0 %v1089
    %1522 = vmatpush1.bf16.msra.mxu0 %v1088
    %1523 = vmatprep.subr.bf16.mxu0 %v1085
    %1524 = vmatpush1.bf16.msra.mxu0 %v1084
    %1525 = vmatprep.subr.bf16.mxu0 %v1145
    %1526 = vmatpush2.bf16.msra.mxu0 %v1144
    %1527 = vmatprep.subr.bf16.mxu0 %v1141
    %1528 = vmatpush2.bf16.msra.mxu0 %v1140
    %1529 = vmatprep.subr.bf16.mxu0 %v1137
    %1530 = vmatpush2.bf16.msra.mxu0 %v1136
    %1531 = vmatprep.subr.bf16.mxu0 %v1133
    %1532 = vmatpush2.bf16.msra.mxu0 %v1132
    %1533 = vmatprep.subr.bf16.mxu0 %v1129
    %1534 = vmatpush2.bf16.msra.mxu0 %v1128
    %1535 = vmatprep.subr.bf16.mxu0 %v1125
    %1536 = vmatpush2.bf16.msra.mxu0 %v1124
    %1537 = vmatprep.subr.bf16.mxu0 %v1121
    %1538 = vmatpush2.bf16.msra.mxu0 %v1120
    %1539 = vmatprep.subr.bf16.mxu0 %v1117
    %1540 = vmatpush2.bf16.msra.mxu0 %v1116
    %1541 = vmatprep.mubr.bf16.mxu0 %v337
    %1542 = vmatmul.mubr.bf16.gmra.mxu0 %v336
    %v1543 = vpop.f32.mrf.mxu0
    %v1544 = vadd.f32 %v1503, %v1543
    %v1545 = vpop.f32.mrf.mxu0
    %v1546 = vadd.f32 %v1505, %v1545
    %v1547 = vpop.f32.mrf.mxu0
    %v1548 = vpop.f32.mrf.mxu0
    %1549 = vdwg.mxu0
    %1550 = vmatprep.subr.bf16.mxu0 %v1177
    %1551 = vmatpush1.bf16.msra.mxu0 %v1176
    %1552 = vmatprep.subr.bf16.mxu0 %v1173
    %1553 = vmatpush1.bf16.msra.mxu0 %v1172
    %1554 = vmatprep.subr.bf16.mxu0 %v1169
    %1555 = vmatpush1.bf16.msra.mxu0 %v1168
    %1556 = vmatprep.subr.bf16.mxu0 %v1165
    %1557 = vmatpush1.bf16.msra.mxu0 %v1164
    %1558 = vmatprep.subr.bf16.mxu0 %v1161
    %1559 = vmatpush1.bf16.msra.mxu0 %v1160
    %1560 = vmatprep.subr.bf16.mxu0 %v1157
    %1561 = vmatpush1.bf16.msra.mxu0 %v1156
    %1562 = vmatprep.subr.bf16.mxu0 %v1153
    %1563 = vmatpush1.bf16.msra.mxu0 %v1152
    %1564 = vmatprep.subr.bf16.mxu0 %v1149
    %1565 = vmatpush1.bf16.msra.mxu0 %v1148
    %1566 = vmatprep.subr.bf16.mxu0 %v1209
    %1567 = vmatpush2.bf16.msra.mxu0 %v1208
    %1568 = vmatprep.subr.bf16.mxu0 %v1205
    %1569 = vmatpush2.bf16.msra.mxu0 %v1204
    %1570 = vmatprep.subr.bf16.mxu0 %v1201
    %1571 = vmatpush2.bf16.msra.mxu0 %v1200
    %1572 = vmatprep.subr.bf16.mxu0 %v1197
    %1573 = vmatpush2.bf16.msra.mxu0 %v1196
    %1574 = vmatprep.subr.bf16.mxu0 %v1193
    %1575 = vmatpush2.bf16.msra.mxu0 %v1192
    %1576 = vmatprep.subr.bf16.mxu0 %v1189
    %1577 = vmatpush2.bf16.msra.mxu0 %v1188
    %1578 = vmatprep.subr.bf16.mxu0 %v1185
    %1579 = vmatpush2.bf16.msra.mxu0 %v1184
    %1580 = vmatprep.subr.bf16.mxu0 %v1181
    %1581 = vmatpush2.bf16.msra.mxu0 %v1180
    %1582 = vmatprep.mubr.bf16.mxu0 %v339
    %1583 = vmatmul.mubr.bf16.gmra.mxu0 %v338
    %v1584 = vpop.f32.mrf.mxu0
    %v1585 = vadd.f32 %v1544, %v1584
    %v1586 = vpop.f32.mrf.mxu0
    %v1587 = vadd.f32 %v1546, %v1586
    %v1588 = vpop.f32.mrf.mxu0
    %v1589 = vpop.f32.mrf.mxu0
    %1590 = vdwg.mxu0
    %1591 = vmatprep.subr.bf16.mxu0 %v1241
    %1592 = vmatpush1.bf16.msra.mxu0 %v1240
    %1593 = vmatprep.subr.bf16.mxu0 %v1237
    %1594 = vmatpush1.bf16.msra.mxu0 %v1236
    %1595 = vmatprep.subr.bf16.mxu0 %v1233
    %1596 = vmatpush1.bf16.msra.mxu0 %v1232
    %1597 = vmatprep.subr.bf16.mxu0 %v1229
    %1598 = vmatpush1.bf16.msra.mxu0 %v1228
    %1599 = vmatprep.subr.bf16.mxu0 %v1225
    %1600 = vmatpush1.bf16.msra.mxu0 %v1224
    %1601 = vmatprep.subr.bf16.mxu0 %v1221
    %1602 = vmatpush1.bf16.msra.mxu0 %v1220
    %1603 = vmatprep.subr.bf16.mxu0 %v1217
    %1604 = vmatpush1.bf16.msra.mxu0 %v1216
    %1605 = vmatprep.subr.bf16.mxu0 %v1213
    %1606 = vmatpush1.bf16.msra.mxu0 %v1212
    %1607 = vmatprep.subr.bf16.mxu0 0
    %1608 = vmatpush2.bf16.msra.mxu0 0
    %1609 = vmatprep.subr.bf16.mxu0 0
    %1610 = vmatpush2.bf16.msra.mxu0 0
    %1611 = vmatprep.subr.bf16.mxu0 0
    %1612 = vmatpush2.bf16.msra.mxu0 0
    %1613 = vmatprep.subr.bf16.mxu0 0
    %1614 = vmatpush2.bf16.msra.mxu0 0
    %1615 = vmatprep.subr.bf16.mxu0 0
    %1616 = vmatpush2.bf16.msra.mxu0 0
    %1617 = vmatprep.subr.bf16.mxu0 0
    %1618 = vmatpush2.bf16.msra.mxu0 0
    %1619 = vmatprep.subr.bf16.mxu0 0
    %1620 = vmatpush2.bf16.msra.mxu0 0
    %1621 = vmatprep.subr.bf16.mxu0 0
    %1622 = vmatpush2.bf16.msra.mxu0 0
    %1623 = vmatprep.mubr.bf16.mxu0 0
    %1624 = vmatmul.mubr.bf16.gmra.mxu0 %v340
    %v1625 = vpop.f32.mrf.mxu0
    %v1626 = vadd.f32 %v1585, %v1625
    %v1627 = vpop.f32.mrf.mxu0
    %v1628 = vadd.f32 %v1587, %v1627
    %v1629 = vpop.f32.mrf.mxu0
    %v1630 = vpop.f32.mrf.mxu0
    %1631 = vdwg.mxu0
    %1632 = vmatprep.subr.bf16.mxu0 %v1051
    %1633 = vmatpush1.bf16.msra.mxu0 %v1050
    %1634 = vmatprep.subr.bf16.mxu0 %v1047
    %1635 = vmatpush1.bf16.msra.mxu0 %v1046
    %1636 = vmatprep.subr.bf16.mxu0 %v1043
    %1637 = vmatpush1.bf16.msra.mxu0 %v1042
    %1638 = vmatprep.subr.bf16.mxu0 %v1039
    %1639 = vmatpush1.bf16.msra.mxu0 %v1038
    %1640 = vmatprep.subr.bf16.mxu0 %v1035
    %1641 = vmatpush1.bf16.msra.mxu0 %v1034
    %1642 = vmatprep.subr.bf16.mxu0 %v1031
    %1643 = vmatpush1.bf16.msra.mxu0 %v1030
    %1644 = vmatprep.subr.bf16.mxu0 %v1027
    %1645 = vmatpush1.bf16.msra.mxu0 %v1026
    %1646 = vmatprep.subr.bf16.mxu0 %v1023
    %1647 = vmatpush1.bf16.msra.mxu0 %v1022
    %1648 = vmatprep.subr.bf16.mxu0 %v1083
    %1649 = vmatpush2.bf16.msra.mxu0 %v1082
    %1650 = vmatprep.subr.bf16.mxu0 %v1079
    %1651 = vmatpush2.bf16.msra.mxu0 %v1078
    %1652 = vmatprep.subr.bf16.mxu0 %v1075
    %1653 = vmatpush2.bf16.msra.mxu0 %v1074
    %1654 = vmatprep.subr.bf16.mxu0 %v1071
    %1655 = vmatpush2.bf16.msra.mxu0 %v1070
    %1656 = vmatprep.subr.bf16.mxu0 %v1067
    %1657 = vmatpush2.bf16.msra.mxu0 %v1066
    %1658 = vmatprep.subr.bf16.mxu0 %v1063
    %1659 = vmatpush2.bf16.msra.mxu0 %v1062
    %1660 = vmatprep.subr.bf16.mxu0 %v1059
    %1661 = vmatpush2.bf16.msra.mxu0 %v1058
    %1662 = vmatprep.subr.bf16.mxu0 %v1055
    %1663 = vmatpush2.bf16.msra.mxu0 %v1054
    %1664 = vmatprep.mubr.bf16.mxu0 %v335
    %1665 = vmatmul.mubr.bf16.gmra.mxu0 %v334
    %v1666 = vpop.f32.mrf.mxu0
    %v1667 = vadd.f32 %v314, %v1666
    %v1668 = vpop.f32.mrf.mxu0
    %v1669 = vadd.f32 %v318, %v1668
    %v1670 = vpop.f32.mrf.mxu0
    %v1671 = vpop.f32.mrf.mxu0
    %1672 = vdwg.mxu0
    %1673 = vmatprep.subr.bf16.mxu0 %v1115
    %1674 = vmatpush1.bf16.msra.mxu0 %v1114
    %1675 = vmatprep.subr.bf16.mxu0 %v1111
    %1676 = vmatpush1.bf16.msra.mxu0 %v1110
    %1677 = vmatprep.subr.bf16.mxu0 %v1107
    %1678 = vmatpush1.bf16.msra.mxu0 %v1106
    %1679 = vmatprep.subr.bf16.mxu0 %v1103
    %1680 = vmatpush1.bf16.msra.mxu0 %v1102
    %1681 = vmatprep.subr.bf16.mxu0 %v1099
    %1682 = vmatpush1.bf16.msra.mxu0 %v1098
    %1683 = vmatprep.subr.bf16.mxu0 %v1095
    %1684 = vmatpush1.bf16.msra.mxu0 %v1094
    %1685 = vmatprep.subr.bf16.mxu0 %v1091
    %1686 = vmatpush1.bf16.msra.mxu0 %v1090
    %1687 = vmatprep.subr.bf16.mxu0 %v1087
    %1688 = vmatpush1.bf16.msra.mxu0 %v1086
    %1689 = vmatprep.subr.bf16.mxu0 %v1147
    %1690 = vmatpush2.bf16.msra.mxu0 %v1146
    %1691 = vmatprep.subr.bf16.mxu0 %v1143
    %1692 = vmatpush2.bf16.msra.mxu0 %v1142
    %1693 = vmatprep.subr.bf16.mxu0 %v1139
    %1694 = vmatpush2.bf16.msra.mxu0 %v1138
    %1695 = vmatprep.subr.bf16.mxu0 %v1135
    %1696 = vmatpush2.bf16.msra.mxu0 %v1134
    %1697 = vmatprep.subr.bf16.mxu0 %v1131
    %1698 = vmatpush2.bf16.msra.mxu0 %v1130
    %1699 = vmatprep.subr.bf16.mxu0 %v1127
    %1700 = vmatpush2.bf16.msra.mxu0 %v1126
    %1701 = vmatprep.subr.bf16.mxu0 %v1123
    %1702 = vmatpush2.bf16.msra.mxu0 %v1122
    %1703 = vmatprep.subr.bf16.mxu0 %v1119
    %1704 = vmatpush2.bf16.msra.mxu0 %v1118
    %1705 = vmatprep.mubr.bf16.mxu0 %v337
    %1706 = vmatmul.mubr.bf16.gmra.mxu0 %v336
    %v1707 = vpop.f32.mrf.mxu0
    %v1708 = vadd.f32 %v1667, %v1707
    %v1709 = vpop.f32.mrf.mxu0
    %v1710 = vadd.f32 %v1669, %v1709
    %v1711 = vpop.f32.mrf.mxu0
    %v1712 = vpop.f32.mrf.mxu0
    %1713 = vdwg.mxu0
    %1714 = vmatprep.subr.bf16.mxu0 %v1179
    %1715 = vmatpush1.bf16.msra.mxu0 %v1178
    %1716 = vmatprep.subr.bf16.mxu0 %v1175
    %1717 = vmatpush1.bf16.msra.mxu0 %v1174
    %1718 = vmatprep.subr.bf16.mxu0 %v1171
    %1719 = vmatpush1.bf16.msra.mxu0 %v1170
    %1720 = vmatprep.subr.bf16.mxu0 %v1167
    %1721 = vmatpush1.bf16.msra.mxu0 %v1166
    %1722 = vmatprep.subr.bf16.mxu0 %v1163
    %1723 = vmatpush1.bf16.msra.mxu0 %v1162
    %1724 = vmatprep.subr.bf16.mxu0 %v1159
    %1725 = vmatpush1.bf16.msra.mxu0 %v1158
    %1726 = vmatprep.subr.bf16.mxu0 %v1155
    %1727 = vmatpush1.bf16.msra.mxu0 %v1154
    %1728 = vmatprep.subr.bf16.mxu0 %v1151
    %1729 = vmatpush1.bf16.msra.mxu0 %v1150
    %1730 = vmatprep.subr.bf16.mxu0 %v1211
    %1731 = vmatpush2.bf16.msra.mxu0 %v1210
    %1732 = vmatprep.subr.bf16.mxu0 %v1207
    %1733 = vmatpush2.bf16.msra.mxu0 %v1206
    %1734 = vmatprep.subr.bf16.mxu0 %v1203
    %1735 = vmatpush2.bf16.msra.mxu0 %v1202
    %1736 = vmatprep.subr.bf16.mxu0 %v1199
    %1737 = vmatpush2.bf16.msra.mxu0 %v1198
    %1738 = vmatprep.subr.bf16.mxu0 %v1195
    %1739 = vmatpush2.bf16.msra.mxu0 %v1194
    %1740 = vmatprep.subr.bf16.mxu0 %v1191
    %1741 = vmatpush2.bf16.msra.mxu0 %v1190
    %1742 = vmatprep.subr.bf16.mxu0 %v1187
    %1743 = vmatpush2.bf16.msra.mxu0 %v1186
    %1744 = vmatprep.subr.bf16.mxu0 %v1183
    %1745 = vmatpush2.bf16.msra.mxu0 %v1182
    %1746 = vmatprep.mubr.bf16.mxu0 %v339
    %1747 = vmatmul.mubr.bf16.gmra.mxu0 %v338
    %v1748 = vpop.f32.mrf.mxu0
    %v1749 = vadd.f32 %v1708, %v1748
    %v1750 = vpop.f32.mrf.mxu0
    %v1751 = vadd.f32 %v1710, %v1750
    %v1752 = vpop.f32.mrf.mxu0
    %v1753 = vpop.f32.mrf.mxu0
    %1754 = vdwg.mxu0
    %1755 = vmatprep.subr.bf16.mxu0 %v1243
    %1756 = vmatpush1.bf16.msra.mxu0 %v1242
    %1757 = vmatprep.subr.bf16.mxu0 %v1239
    %1758 = vmatpush1.bf16.msra.mxu0 %v1238
    %1759 = vmatprep.subr.bf16.mxu0 %v1235
    %1760 = vmatpush1.bf16.msra.mxu0 %v1234
    %1761 = vmatprep.subr.bf16.mxu0 %v1231
    %1762 = vmatpush1.bf16.msra.mxu0 %v1230
    %1763 = vmatprep.subr.bf16.mxu0 %v1227
    %1764 = vmatpush1.bf16.msra.mxu0 %v1226
    %1765 = vmatprep.subr.bf16.mxu0 %v1223
    %1766 = vmatpush1.bf16.msra.mxu0 %v1222
    %1767 = vmatprep.subr.bf16.mxu0 %v1219
    %1768 = vmatpush1.bf16.msra.mxu0 %v1218
    %1769 = vmatprep.subr.bf16.mxu0 %v1215
    %1770 = vmatpush1.bf16.msra.mxu0 %v1214
    %1771 = vmatprep.subr.bf16.mxu0 0
    %1772 = vmatpush2.bf16.msra.mxu0 0
    %1773 = vmatprep.subr.bf16.mxu0 0
    %1774 = vmatpush2.bf16.msra.mxu0 0
    %1775 = vmatprep.subr.bf16.mxu0 0
    %1776 = vmatpush2.bf16.msra.mxu0 0
    %1777 = vmatprep.subr.bf16.mxu0 0
    %1778 = vmatpush2.bf16.msra.mxu0 0
    %1779 = vmatprep.subr.bf16.mxu0 0
    %1780 = vmatpush2.bf16.msra.mxu0 0
    %1781 = vmatprep.subr.bf16.mxu0 0
    %1782 = vmatpush2.bf16.msra.mxu0 0
    %1783 = vmatprep.subr.bf16.mxu0 0
    %1784 = vmatpush2.bf16.msra.mxu0 0
    %1785 = vmatprep.subr.bf16.mxu0 0
    %1786 = vmatpush2.bf16.msra.mxu0 0
    %1787 = vmatprep.mubr.bf16.mxu0 0
    %1788 = vmatmul.mubr.bf16.gmra.mxu0 %v340
    %v1789 = vpop.f32.mrf.mxu0
    %v1790 = vadd.f32 %v1749, %v1789
    %v1791 = vpop.f32.mrf.mxu0
    %v1792 = vadd.f32 %v1751, %v1791
    %v1793 = vpop.f32.mrf.mxu0
    %v1794 = vpop.f32.mrf.mxu0
    %1795 = vdwg.mxu0
    %v1796 = vmax.f32 %v1626, 0.0
    %v1797 = vmax.f32 %v1628, 0.0
    %v1798 = vmax.f32 %v1790, 0.0
    %v1799 = vmax.f32 %v1792, 0.0
    %v1800 = vpack.c.bf16 %v1796, %v1796
    %v1801 = vpack.c.bf16 %v1797, %v1797
    %v1802 = vpack.c.bf16 %v1798, %v1798
    %v1803 = vpack.c.bf16 %v1799, %v1799
    %v1804 = vld [vmem:[#allocation8] sm:$0xf]
    %v1805 = vld [vmem:[#allocation8 + $0x4] sm:$0xf]
    %v1806 = vld [vmem:[#allocation8 + $0x8] sm:$0xf]
    %v1807 = vld [vmem:[#allocation8 + $0xc] sm:$0xf]
    %v1808 = vld [vmem:[#allocation8 + $0x10] sm:$0xf]
    %v1809 = vld [vmem:[#allocation8 + $0x14] sm:$0xf]
    %v1810 = vld [vmem:[#allocation8 + $0x18] sm:$0xf]
    %v1811 = vld [vmem:[#allocation8 + $0x1c] sm:$0xf]
    %v1812 = vld [vmem:[#allocation8 + $0x20] sm:$0xf]
    %v1813 = vld [vmem:[#allocation8 + $0x24] sm:$0xf]
    %v1814 = vld [vmem:[#allocation8 + $0x28] sm:$0xf]
    %v1815 = vld [vmem:[#allocation8 + $0x2c] sm:$0xf]
    %v1816 = vld [vmem:[#allocation8 + $0x30] sm:$0xf]
    %v1817 = vld [vmem:[#allocation8 + $0x34] sm:$0xf]
    %v1818 = vld [vmem:[#allocation8 + $0x38] sm:$0xf]
    %v1819 = vld [vmem:[#allocation8 + $0x3c] sm:$0xf]
    %v1820 = vld [vmem:[#allocation8 + $0x40] sm:$0xf]
    %v1821 = vld [vmem:[#allocation8 + $0x44] sm:$0xf]
    %v1822 = vld [vmem:[#allocation8 + $0x48] sm:$0xf]
    %v1823 = vld [vmem:[#allocation8 + $0x4c] sm:$0xf]
    %v1824 = vld [vmem:[#allocation8 + $0x50] sm:$0xf]
    %v1825 = vld [vmem:[#allocation8 + $0x54] sm:$0xf]
    %v1826 = vld [vmem:[#allocation8 + $0x58] sm:$0xf]
    %v1827 = vld [vmem:[#allocation8 + $0x5c] sm:$0xf]
    %v1828 = vld [vmem:[#allocation8 + $0x60] sm:$0xf]
    %v1829 = vld [vmem:[#allocation8 + $0x64] sm:$0xf]
    %v1830 = vld [vmem:[#allocation8 + $0x68] sm:$0xf]
    %v1831 = vld [vmem:[#allocation8 + $0x6c] sm:$0xf]
    %v1832 = vld [vmem:[#allocation8 + $0x70] sm:$0xf]
    %v1833 = vld [vmem:[#allocation8 + $0x74] sm:$0xf]
    %v1834 = vld [vmem:[#allocation8 + $0x78] sm:$0xf]
    %v1835 = vld [vmem:[#allocation8 + $0x7c] sm:$0xf]
    %v1836 = vld [vmem:[#allocation8 + $0x80] sm:$0xf]
    %v1837 = vld [vmem:[#allocation8 + $0x84] sm:$0xf]
    %v1838 = vld [vmem:[#allocation8 + $0x88] sm:$0xf]
    %v1839 = vld [vmem:[#allocation8 + $0x8c] sm:$0xf]
    %v1840 = vld [vmem:[#allocation8 + $0x90] sm:$0xf]
    %v1841 = vld [vmem:[#allocation8 + $0x94] sm:$0xf]
    %v1842 = vld [vmem:[#allocation8 + $0x98] sm:$0xf]
    %v1843 = vld [vmem:[#allocation8 + $0x9c] sm:$0xf]
    %v1844 = vld [vmem:[#allocation8 + $0xa0] sm:$0xf]
    %v1845 = vld [vmem:[#allocation8 + $0xa4] sm:$0xf]
    %v1846 = vld [vmem:[#allocation8 + $0xa8] sm:$0xf]
    %v1847 = vld [vmem:[#allocation8 + $0xac] sm:$0xf]
    %v1848 = vld [vmem:[#allocation8 + $0xb0] sm:$0xf]
    %v1849 = vld [vmem:[#allocation8 + $0xb4] sm:$0xf]
    %v1850 = vld [vmem:[#allocation8 + $0xb8] sm:$0xf]
    %v1851 = vld [vmem:[#allocation8 + $0xbc] sm:$0xf]
    %v1852 = vld [vmem:[#allocation8 + $0xc0] sm:$0xf]
    %v1853 = vld [vmem:[#allocation8 + $0xc4] sm:$0xf]
    %v1854 = vld [vmem:[#allocation8 + $0xc8] sm:$0xf]
    %v1855 = vld [vmem:[#allocation8 + $0xcc] sm:$0xf]
    %v1856 = vld [vmem:[#allocation8 + $0xd0] sm:$0xf]
    %v1857 = vld [vmem:[#allocation8 + $0xd4] sm:$0xf]
    %v1858 = vld [vmem:[#allocation8 + $0xd8] sm:$0xf]
    %v1859 = vld [vmem:[#allocation8 + $0xdc] sm:$0xf]
    %v1860 = vld [vmem:[#allocation8 + $0xe0] sm:$0xf]
    %v1861 = vld [vmem:[#allocation8 + $0xe4] sm:$0xf]
    %v1862 = vld [vmem:[#allocation8 + $0xe8] sm:$0xf]
    %v1863 = vld [vmem:[#allocation8 + $0xec] sm:$0xf]
    %v1864 = vld [vmem:[#allocation8 + $0xf0] sm:$0xf]
    %v1865 = vld [vmem:[#allocation8 + $0xf4] sm:$0xf]
    %v1866 = vld [vmem:[#allocation8 + $0xf8] sm:$0xf]
    %v1867 = vld [vmem:[#allocation8 + $0xfc] sm:$0xf]
    %v1868 = vld [vmem:[%s4] sm:$0x1]
    %v1870 = vlaneseq
    %v1871 = vshrl.u32 %v1870, 7
    %v1872 = vsub.s32 0, %v1871
    %v1873 = vrot.slane %v1868, %v1872
    %v1939 = vunpack.c.l.b16 %v1804
    %v1940 = vunpack.c.l.b16 %v1805
    %v1941 = vunpack.c.l.b16 %v1806
    %v1942 = vunpack.c.l.b16 %v1807
    %v1943 = vunpack.c.l.b16 %v1808
    %v1944 = vunpack.c.l.b16 %v1809
    %v1945 = vunpack.c.l.b16 %v1810
    %v1946 = vunpack.c.l.b16 %v1811
    %v1947 = vunpack.c.l.b16 %v1812
    %v1948 = vunpack.c.l.b16 %v1813
    %v1949 = vunpack.c.l.b16 %v1814
    %v1950 = vunpack.c.l.b16 %v1815
    %v1951 = vunpack.c.l.b16 %v1816
    %v1952 = vunpack.c.l.b16 %v1817
    %v1953 = vunpack.c.l.b16 %v1818
    %v1954 = vunpack.c.l.b16 %v1819
    %v1955 = vunpack.c.l.b16 %v1820
    %v1956 = vunpack.c.l.b16 %v1821
    %v1957 = vunpack.c.l.b16 %v1822
    %v1958 = vunpack.c.l.b16 %v1823
    %v1959 = vunpack.c.l.b16 %v1824
    %v1960 = vunpack.c.l.b16 %v1825
    %v1961 = vunpack.c.l.b16 %v1826
    %v1962 = vunpack.c.l.b16 %v1827
    %v1963 = vunpack.c.l.b16 %v1828
    %v1964 = vunpack.c.l.b16 %v1829
    %v1965 = vunpack.c.l.b16 %v1830
    %v1966 = vunpack.c.l.b16 %v1831
    %v1967 = vunpack.c.l.b16 %v1832
    %v1968 = vunpack.c.l.b16 %v1833
    %v1969 = vunpack.c.l.b16 %v1834
    %v1970 = vunpack.c.l.b16 %v1835
    %v1971 = vunpack.c.l.b16 %v1836
    %v1972 = vunpack.c.l.b16 %v1837
    %v1973 = vunpack.c.l.b16 %v1838
    %v1974 = vunpack.c.l.b16 %v1839
    %v1975 = vunpack.c.l.b16 %v1840
    %v1976 = vunpack.c.l.b16 %v1841
    %v1977 = vunpack.c.l.b16 %v1842
    %v1978 = vunpack.c.l.b16 %v1843
    %v1979 = vunpack.c.l.b16 %v1844
    %v1980 = vunpack.c.l.b16 %v1845
    %v1981 = vunpack.c.l.b16 %v1846
    %v1982 = vunpack.c.l.b16 %v1847
    %v1983 = vunpack.c.l.b16 %v1848
    %v1984 = vunpack.c.l.b16 %v1849
    %v1985 = vunpack.c.l.b16 %v1850
    %v1986 = vunpack.c.l.b16 %v1851
    %v1987 = vunpack.c.l.b16 %v1852
    %v1988 = vunpack.c.l.b16 %v1853
    %v1989 = vunpack.c.l.b16 %v1854
    %v1990 = vunpack.c.l.b16 %v1855
    %v1991 = vunpack.c.l.b16 %v1856
    %v1992 = vunpack.c.l.b16 %v1857
    %v1993 = vunpack.c.l.b16 %v1858
    %v1994 = vunpack.c.l.b16 %v1859
    %v1995 = vunpack.c.l.b16 %v1860
    %v1996 = vunpack.c.l.b16 %v1861
    %v1997 = vunpack.c.l.b16 %v1862
    %v1998 = vunpack.c.l.b16 %v1863
    %v1999 = vunpack.c.l.b16 %v1864
    %v2000 = vunpack.c.l.b16 %v1865
    %v2001 = vunpack.c.l.b16 %v1866
    %v2002 = vunpack.c.l.b16 %v1867
    %v2003 = vpack.c.b16 %v1940, %v1939
    %v2004 = vpack.c.b16 %v1942, %v1941
    %v2005 = vpack.c.b16 %v1944, %v1943
    %v2006 = vpack.c.b16 %v1946, %v1945
    %v2007 = vpack.c.b16 %v1948, %v1947
    %v2008 = vpack.c.b16 %v1950, %v1949
    %v2009 = vpack.c.b16 %v1952, %v1951
    %v2010 = vpack.c.b16 %v1954, %v1953
    %v2011 = vpack.c.b16 %v1956, %v1955
    %v2012 = vpack.c.b16 %v1958, %v1957
    %v2013 = vpack.c.b16 %v1960, %v1959
    %v2014 = vpack.c.b16 %v1962, %v1961
    %v2015 = vpack.c.b16 %v1964, %v1963
    %v2016 = vpack.c.b16 %v1966, %v1965
    %v2017 = vpack.c.b16 %v1968, %v1967
    %v2018 = vpack.c.b16 %v1970, %v1969
    %v2019 = vpack.c.b16 %v1972, %v1971
    %v2020 = vpack.c.b16 %v1974, %v1973
    %v2021 = vpack.c.b16 %v1976, %v1975
    %v2022 = vpack.c.b16 %v1978, %v1977
    %v2023 = vpack.c.b16 %v1980, %v1979
    %v2024 = vpack.c.b16 %v1982, %v1981
    %v2025 = vpack.c.b16 %v1984, %v1983
    %v2026 = vpack.c.b16 %v1986, %v1985
    %v2027 = vpack.c.b16 %v1988, %v1987
    %v2028 = vpack.c.b16 %v1990, %v1989
    %v2029 = vpack.c.b16 %v1992, %v1991
    %v2030 = vpack.c.b16 %v1994, %v1993
    %v2031 = vpack.c.b16 %v1996, %v1995
    %v2032 = vpack.c.b16 %v1998, %v1997
    %v2033 = vpack.c.b16 %v2000, %v1999
    %v2034 = vpack.c.b16 %v2002, %v2001
    %2067 = vmatprep.subr.bf16.mxu0 0
    %2068 = vmatpush1.bf16.msra.mxu0 %v2010
    %2069 = vmatprep.subr.bf16.mxu0 0
    %2070 = vmatpush1.bf16.msra.mxu0 %v2009
    %2071 = vmatprep.subr.bf16.mxu0 0
    %2072 = vmatpush1.bf16.msra.mxu0 %v2008
    %2073 = vmatprep.subr.bf16.mxu0 0
    %2074 = vmatpush1.bf16.msra.mxu0 %v2007
    %2075 = vmatprep.subr.bf16.mxu0 0
    %2076 = vmatpush1.bf16.msra.mxu0 %v2006
    %2077 = vmatprep.subr.bf16.mxu0 0
    %2078 = vmatpush1.bf16.msra.mxu0 %v2005
    %2079 = vmatprep.subr.bf16.mxu0 0
    %2080 = vmatpush1.bf16.msra.mxu0 %v2004
    %2081 = vmatprep.subr.bf16.mxu0 0
    %2082 = vmatpush1.bf16.msra.mxu0 %v2003
    %2083 = vmatprep.subr.bf16.mxu0 0
    %2084 = vmatpush2.bf16.msra.mxu0 %v2018
    %2085 = vmatprep.subr.bf16.mxu0 0
    %2086 = vmatpush2.bf16.msra.mxu0 %v2017
    %2087 = vmatprep.subr.bf16.mxu0 0
    %2088 = vmatpush2.bf16.msra.mxu0 %v2016
    %2089 = vmatprep.subr.bf16.mxu0 0
    %2090 = vmatpush2.bf16.msra.mxu0 %v2015
    %2091 = vmatprep.subr.bf16.mxu0 0
    %2092 = vmatpush2.bf16.msra.mxu0 %v2014
    %2093 = vmatprep.subr.bf16.mxu0 0
    %2094 = vmatpush2.bf16.msra.mxu0 %v2013
    %2095 = vmatprep.subr.bf16.mxu0 0
    %2096 = vmatpush2.bf16.msra.mxu0 %v2012
    %2097 = vmatprep.subr.bf16.mxu0 0
    %2098 = vmatpush2.bf16.msra.mxu0 %v2011
    %2099 = vmatprep.mubr.bf16.mxu0 %v1801
    %2100 = vmatmul.mubr.bf16.gmra.mxu0 %v1800
    %v2101 = vpop.f32.mrf.mxu0
    %v2102 = vadd.f32 %v1873, %v2101
    %v2103 = vpop.f32.mrf.mxu0
    %v2104 = vpop.f32.mrf.mxu0
    %v2105 = vpop.f32.mrf.mxu0
    %2106 = vdwg.mxu0
    %2107 = vmatprep.subr.bf16.mxu0 0
    %2108 = vmatpush1.bf16.msra.mxu0 %v2026
    %2109 = vmatprep.subr.bf16.mxu0 0
    %2110 = vmatpush1.bf16.msra.mxu0 %v2025
    %2111 = vmatprep.subr.bf16.mxu0 0
    %2112 = vmatpush1.bf16.msra.mxu0 %v2024
    %2113 = vmatprep.subr.bf16.mxu0 0
    %2114 = vmatpush1.bf16.msra.mxu0 %v2023
    %2115 = vmatprep.subr.bf16.mxu0 0
    %2116 = vmatpush1.bf16.msra.mxu0 %v2022
    %2117 = vmatprep.subr.bf16.mxu0 0
    %2118 = vmatpush1.bf16.msra.mxu0 %v2021
    %2119 = vmatprep.subr.bf16.mxu0 0
    %2120 = vmatpush1.bf16.msra.mxu0 %v2020
    %2121 = vmatprep.subr.bf16.mxu0 0
    %2122 = vmatpush1.bf16.msra.mxu0 %v2019
    %2123 = vmatprep.subr.bf16.mxu0 0
    %2124 = vmatpush2.bf16.msra.mxu0 %v2034
    %2125 = vmatprep.subr.bf16.mxu0 0
    %2126 = vmatpush2.bf16.msra.mxu0 %v2033
    %2127 = vmatprep.subr.bf16.mxu0 0
    %2128 = vmatpush2.bf16.msra.mxu0 %v2032
    %2129 = vmatprep.subr.bf16.mxu0 0
    %2130 = vmatpush2.bf16.msra.mxu0 %v2031
    %2131 = vmatprep.subr.bf16.mxu0 0
    %2132 = vmatpush2.bf16.msra.mxu0 %v2030
    %2133 = vmatprep.subr.bf16.mxu0 0
    %2134 = vmatpush2.bf16.msra.mxu0 %v2029
    %2135 = vmatprep.subr.bf16.mxu0 0
    %2136 = vmatpush2.bf16.msra.mxu0 %v2028
    %2137 = vmatprep.subr.bf16.mxu0 0
    %2138 = vmatpush2.bf16.msra.mxu0 %v2027
    %2139 = vmatprep.mubr.bf16.mxu0 %v1803
    %2140 = vmatmul.mubr.bf16.gmra.mxu0 %v1802
    %v2141 = vpop.f32.mrf.mxu0
    %v2142 = vadd.f32 %v2102, %v2141
    %v2143 = vpop.f32.mrf.mxu0
    %v2144 = vpop.f32.mrf.mxu0
    %v2145 = vpop.f32.mrf.mxu0
    %2146 = vdwg.mxu0
    %2147 = vst [vmem:[#allocation10] sm:$0xff] %v2142
    // Predicated region
    $region38: #{tpu_custom_call.1} parent=1 // pred_check
      _
    $region39: #{tpu_custom_call.1} parent=1 // pred_check_branch
      %2149 = sbr.rel (0) target = $region41
    $region40: #{tpu_custom_call.1} parent=1 // pred_region
      %s2151 = ssub.s32 128, 128
      %2152 = vsyncadd [#allocation4], %s2151
      %s2154 = sshll.u32 [#allocation10], 4
      %s2155 = int_to_ptr.vmem [resolvable:$true] %s2154
      %2157 = dma.vmem_to_hbm [thread:$0]  %s2155, 128, %s5, [#allocation4]
    $region41: #{tpu_custom_call.1} parent=1 // pred_fallthru
      _
    // Predicated region
    $region42: #{tpu_custom_call.1} parent=1 // pred_check
      _
    $region43: #{tpu_custom_call.1} parent=1 // pred_check_branch
      %2159 = sbr.rel (0) target = $region45
    $region44: #{tpu_custom_call.1} parent=1 // pred_region
      %2160 = dma.done [#allocation4], 128
    $region45: #{tpu_custom_call.1} parent=1 // pred_fallthru
      _
    %2161 = vsyncpa [#allocation3], 1
    %2162 = vsyncpa [#allocation6], 1
    %2163 = vsyncpa [#allocation9], 1
    %2164 = vsyncpa [#allocation4], 1

</llo_original>
